<compile_context>
chip_gen: v5e
topology: v5e:2x2
jax: 0.10.0
libtpu: 0.0.40
codegen_flags: <defaults>
</compile_context>

<pallas_src>
import jax
import jax.numpy as jnp
from jax.experimental import pallas as pl
from jax.experimental.pallas import tpu as pltpu


IN_DIM = 259          # true input features
K_PAD = 384           # fc1 contraction padded to a lane-aligned size (3 * 128)
HID = 512
OUT_DIM = 2           # (steering, throttle)
OUT_PAD = 128         # lane-dense output width; real columns are [:, :2]
MAX_TB = 512          # batch-tile cap (keeps VMEM well under scoped limits)
INITIAL_SIGMA = 0.5


def _round_up(n, m):
    return ((n + m - 1) // m) * m


def _batch_tiling(B):
    """Pick (TB, B_pad).

    TB is a multiple of 8; we use >= 2 tiles whenever B > 8 so v7x's two
    TensorCores both get work, and balance the tile so padding waste stays
    below one 8-row sublane group per tile (e.g. B=520 -> TB=264, not 512).
    """
    B8 = _round_up(max(B, 1), 8)
    n_tiles = max(pl.cdiv(B8, MAX_TB), 2 if B8 > 8 else 1)
    TB = _round_up(pl.cdiv(B8, n_tiles), 8)
    return TB, TB * n_tiles


def _actor_kernel(x_ref, w1_ref, b1_ref, w2_ref, b2_ref, w3_ref, b3_ref,
                  mu_ref, xpad_ref):
    # Zero-padded copy of the x tile in VMEM.  Columns [IN_DIM:K_PAD] are
    # explicitly zeroed every step, so the fc1 contraction is exact even
    # though the HBM input only carries 259 feature columns.
    xpad_ref[:, :IN_DIM] = x_ref[...].astype(xpad_ref.dtype)
    xpad_ref[:, IN_DIM:] = jnp.zeros(
        (xpad_ref.shape[0], K_PAD - IN_DIM), xpad_ref.dtype)

    # fc1 + relu
    h1 = jnp.dot(xpad_ref[...], w1_ref[...], preferred_element_type=jnp.float32)
    h1 = jnp.maximum(h1 + b1_ref[...], 0.0)
    # fc2 + relu
    h2 = jnp.dot(h1.astype(w2_ref.dtype), w2_ref[...],
                 preferred_element_type=jnp.float32)
    h2 = jnp.maximum(h2 + b2_ref[...], 0.0)
    # fc3 + tanh; padded output columns are tanh(0 @ w + 0) == 0 and are
    # sliced away in the wrapper.
    raw = jnp.dot(h2.astype(w3_ref.dtype), w3_ref[...],
                  preferred_element_type=jnp.float32) + b3_ref[...]
    mu_ref[...] = jnp.tanh(raw).astype(mu_ref.dtype)


def prepare_params(params, matmul_dtype=jnp.bfloat16):
    """One-time padding / casting of the Actor weights for the kernel.

    Call this once (outside the per-step path).  bf16 operands are MXU-native
    on v5e/v6e/v7x; pass jnp.float32 for tighter numerics at higher MXU cost.
    Biases stay f32 (added after the f32-accumulated matmul).
    """
    w1, b1, w2, b2, w3, b3 = params
    w1_p = jnp.zeros((K_PAD, HID), matmul_dtype).at[:IN_DIM, :].set(
        w1.astype(matmul_dtype))
    w3_p = jnp.zeros((HID, OUT_PAD), matmul_dtype).at[:, :OUT_DIM].set(
        w3.astype(matmul_dtype))
    b3_p = jnp.zeros((1, OUT_PAD), jnp.float32).at[:, :OUT_DIM].set(
        b3.reshape(1, OUT_DIM).astype(jnp.float32))
    return (w1_p,
            b1.reshape(1, HID).astype(jnp.float32),
            w2.astype(matmul_dtype),
            b2.reshape(1, HID).astype(jnp.float32),
            w3_p,
            b3_p)


@jax.jit
def actor_forward(x, prepared_params, sigma=INITIAL_SIGMA):
    """Returns (mu, cov), the parameters of the Actor's MultivariateNormal.

    `sigma` is a runtime (traced) scalar so exploration decay never retraces.
    `prepared_params` must come from prepare_params().
    """
    w1_p, b1, w2_p, b2, w3_p, b3_p = prepared_params
    B = x.shape[0]
    TB, B_pad = _batch_tiling(B)

    # Only cheap batch-row padding is materialized (identity when B is already
    # a multiple of TB); K padding happens in a VMEM scratch inside the kernel.
    x_pad = jnp.pad(x, ((0, B_pad - B), (0, 0)))

    mu_padded = pl.pallas_call(
        _actor_kernel,
        out_shape=jax.ShapeDtypeStruct((B_pad, OUT_PAD), jnp.float32),
        grid=(B_pad // TB,),
        in_specs=[
            pl.BlockSpec((TB, IN_DIM), lambda i: (i, 0)),     # x tile (raw K)
            pl.BlockSpec((K_PAD, HID), lambda i: (0, 0)),     # w1 (resident)
            pl.BlockSpec((1, HID), lambda i: (0, 0)),         # b1
            pl.BlockSpec((HID, HID), lambda i: (0, 0)),       # w2 (resident)
            pl.BlockSpec((1, HID), lambda i: (0, 0)),         # b2
            pl.BlockSpec((HID, OUT_PAD), lambda i: (0, 0)),   # w3 (padded)
            pl.BlockSpec((1, OUT_PAD), lambda i: (0, 0)),     # b3 (padded)
        ],
        out_specs=pl.BlockSpec((TB, OUT_PAD), lambda i: (i, 0)),
        scratch_shapes=[pltpu.VMEM((TB, K_PAD), w1_p.dtype)],
        compiler_params=pltpu.CompilerParams(
            dimension_semantics=("parallel",),
            vmem_limit_bytes=32 << 20,
        ),
    )(x_pad, w1_p, b1, w2_p, b2, w3_p, b3_p)

    mu = mu_padded[:B, :OUT_DIM]

    # Covariance: constant diagonal sigma^2 (clamped at 1e-6), built in the
    # wrapper - not worth a lane-sparse kernel output.
    sigma_sq = jnp.maximum(jnp.asarray(sigma, jnp.float32) ** 2, 1e-6)
    cov = jnp.broadcast_to(sigma_sq * jnp.eye(OUT_DIM, dtype=jnp.float32),
                           (B, OUT_DIM, OUT_DIM))
    return mu, cov


def init_params(key):
    """Deterministic init mimicking nn.Linear default U(-1/sqrt(fan_in), ...)."""
    ks = jax.random.split(key, 6)

    def lin(kw, kb, fan_in, fan_out):
        bound = 1.0 / jnp.sqrt(fan_in)
        w = jax.random.uniform(kw, (fan_in, fan_out), jnp.float32, -bound, bound)
        b = jax.random.uniform(kb, (1, fan_out), jnp.float32, -bound, bound)
        return w, b

    w1, b1 = lin(ks[0], ks[1], IN_DIM, HID)
    w2, b2 = lin(ks[2], ks[3], HID, HID)
    w3, b3 = lin(ks[4], ks[5], HID, OUT_DIM)
    return (w1, b1, w2, b2, w3, b3)


def actor_forward_ref(x, params, sigma=INITIAL_SIGMA):
    """Pure-JAX f32 reference of the same forward pass."""
    w1, b1, w2, b2, w3, b3 = params
    h1 = jnp.maximum(x @ w1 + b1, 0.0)
    h2 = jnp.maximum(h1 @ w2 + b2, 0.0)
    mu = jnp.tanh(h2 @ w3 + b3)
    sigma_sq = max(sigma ** 2, 1e-6)
    cov = jnp.broadcast_to(sigma_sq * jnp.eye(OUT_DIM, dtype=jnp.float32),
                           (x.shape[0], OUT_DIM, OUT_DIM))
    return mu, cov


def actor_mu_ref_cast(x, params, matmul_dtype):
    """Reference that mirrors the kernel's matmul operand dtype layer-by-layer
    (f32 accumulation, f32 bias/ReLU/tanh) - used for a tight numerics check."""
    w1, b1, w2, b2, w3, b3 = params
    d = matmul_dtype
    h1 = jnp.maximum(jnp.dot(x.astype(d), w1.astype(d),
                             preferred_element_type=jnp.float32) + b1, 0.0)
    h2 = jnp.maximum(jnp.dot(h1.astype(d), w2.astype(d),
                             preferred_element_type=jnp.float32) + b2, 0.0)
    raw = jnp.dot(h2.astype(d), w3.astype(d),
                  preferred_element_type=jnp.float32) + b3
    return jnp.tanh(raw)


if __name__ == "__main__":
    key = jax.random.PRNGKey(0)
    k_param, k_x1, k_x2 = jax.random.split(key, 3)

    params = init_params(k_param)
    prepared = prepare_params(params)        # bf16 matmul operands (default)
    jax.block_until_ready(prepared)

    # Case 1: B=12 -> batch padded to 16, grid of 2 tiles (v7x megacore path,
    # exercises batch padding + scratch reuse across grid steps).
    B1 = 12
    x1 = jax.random.normal(k_x1, (B1, IN_DIM), jnp.float32)
    mu1, cov1 = actor_forward(x1, prepared, INITIAL_SIGMA)
    jax.block_until_ready((mu1, cov1))
    assert mu1.shape == (B1, OUT_DIM) and cov1.shape == (B1, OUT_DIM, OUT_DIM)

    mu1_cast = actor_mu_ref_cast(x1, params, jnp.bfloat16)
    mu1_ref, cov1_ref = actor_forward_ref(x1, params, INITIAL_SIGMA)
    # Tight check vs. dtype-matched reference: validates K/OUT padding and the
    # VMEM zero-pad scratch logic exactly.
    assert jnp.allclose(mu1, mu1_cast, atol=5e-3, rtol=5e-3)
    # Loose check vs. full-f32 reference: only bf16 operand quantization left.
    assert jnp.allclose(mu1, mu1_ref, atol=5e-2, rtol=5e-2)
    assert jnp.allclose(cov1, cov1_ref, atol=1e-6, rtol=1e-6)

    # Case 2: tiny batch (B=4 -> single 8-row tile, grid of 1) with a decayed
    # sigma (runtime scalar -> no retrace of the kernel path).
    B2 = 4
    x2 = jax.random.normal(k_x2, (B2, IN_DIM), jnp.float32)
    mu2, cov2 = actor_forward(x2, prepared, 0.25)
    jax.block_until_ready((mu2, cov2))
    mu2_cast = actor_mu_ref_cast(x2, params, jnp.bfloat16)
    assert mu2.shape == (B2, OUT_DIM) and cov2.shape == (B2, OUT_DIM, OUT_DIM)
    assert jnp.allclose(mu2, mu2_cast, atol=5e-3, rtol=5e-3)
    assert jnp.allclose(cov2, (0.25 ** 2) * jnp.eye(OUT_DIM)[None], atol=1e-6)

    # TODO(synk): torch.distributions.MultivariateNormal object itself has no
    # Pallas equivalent; the kernel produces its parameters (mu, covariance).
    print("KERNEL_OK")
</pallas_src>

<mosaic_0001>
module attributes {stable_mosaic.version = 11 : i64} {
  func.func @_actor_kernel(%arg0: i32, %arg1: memref<8x259xf32, #tpu.memory_space<vmem>>, %arg2: memref<384x512xbf16, #tpu.memory_space<vmem>>, %arg3: memref<1x512xf32, #tpu.memory_space<vmem>>, %arg4: memref<512x512xbf16, #tpu.memory_space<vmem>>, %arg5: memref<1x512xf32, #tpu.memory_space<vmem>>, %arg6: memref<512x128xbf16, #tpu.memory_space<vmem>>, %arg7: memref<1x128xf32, #tpu.memory_space<vmem>>, %arg8: memref<8x128xf32, #tpu.memory_space<vmem>>, %arg9: memref<8x384xbf16, #tpu.memory_space<vmem>>) attributes {dimension_semantics = [#tpu.dimension_semantics<parallel>], iteration_bounds = array<i64: 2>, scalar_prefetch = 0 : i64, scratch_operands = 1 : i64, tpu.core_type = #tpu.core_type<tc>, window_params = [{transform_indices = @transform_0, window_bounds = array<i64: 8, 259>}, {pipeline_mode = #tpu.pipeline_mode<synchronous>, transform_indices = @transform_1, window_bounds = array<i64: 384, 512>}, {pipeline_mode = #tpu.pipeline_mode<synchronous>, transform_indices = @transform_2, window_bounds = array<i64: 1, 512>}, {pipeline_mode = #tpu.pipeline_mode<synchronous>, transform_indices = @transform_3, window_bounds = array<i64: 512, 512>}, {pipeline_mode = #tpu.pipeline_mode<synchronous>, transform_indices = @transform_4, window_bounds = array<i64: 1, 512>}, {pipeline_mode = #tpu.pipeline_mode<synchronous>, transform_indices = @transform_5, window_bounds = array<i64: 512, 128>}, {pipeline_mode = #tpu.pipeline_mode<synchronous>, transform_indices = @transform_6, window_bounds = array<i64: 1, 128>}, {transform_indices = @transform_7, window_bounds = array<i64: 8, 128>}]} {
    %c0 = arith.constant 0 : index
    %c0_0 = arith.constant 0 : index
    %0 = vector.load %arg1[%c0, %c0_0] : memref<8x259xf32, #tpu.memory_space<vmem>>, vector<8x259xf32>
    %1 = arith.truncf %0 : vector<8x259xf32> to vector<8x259xbf16>
    %c0_1 = arith.constant 0 : index
    %c0_2 = arith.constant 0 : index
    %2 = vector.load %arg9[%c0_1, %c0_2] : memref<8x384xbf16, #tpu.memory_space<vmem>>, vector<8x259xbf16>
    tpu.vector_store %arg9[%c0_1, %c0_2], %1 {strides = array<i32>} : memref<8x384xbf16, #tpu.memory_space<vmem>>, vector<8x259xbf16>,
    %cst = arith.constant 0.000000e+00 : bf16
    %3 = vector.broadcast %cst : bf16 to vector<8x125xbf16>
    %c0_3 = arith.constant 0 : index
    %c259 = arith.constant 259 : index
    %4 = vector.load %arg9[%c0_3, %c259] : memref<8x384xbf16, #tpu.memory_space<vmem>>, vector<8x125xbf16>
    tpu.vector_store %arg9[%c0_3, %c259], %3 {strides = array<i32>} : memref<8x384xbf16, #tpu.memory_space<vmem>>, vector<8x125xbf16>,
    %c0_4 = arith.constant 0 : index
    %c0_5 = arith.constant 0 : index
    %5 = vector.load %arg9[%c0_4, %c0_5] : memref<8x384xbf16, #tpu.memory_space<vmem>>, vector<8x384xbf16>
    %c0_6 = arith.constant 0 : index
    %c0_7 = arith.constant 0 : index
    %6 = vector.load %arg2[%c0_6, %c0_7] : memref<384x512xbf16, #tpu.memory_space<vmem>>, vector<384x512xbf16>
    %cst_8 = arith.constant dense<0.000000e+00> : vector<8x512xf32>
    %7 = tpu.matmul %5, %6, %cst_8 {dimension_numbers = #tpu.dot_dimension_numbers<[1], [0], [0], [1], [0, 0, 1, 1], [], []>} : vector<8x384xbf16>, vector<384x512xbf16>, vector<8x512xf32> -> vector<8x512xf32>
    %c0_9 = arith.constant 0 : index
    %c0_10 = arith.constant 0 : index
    %8 = vector.load %arg3[%c0_9, %c0_10] : memref<1x512xf32, #tpu.memory_space<vmem>>, vector<1x512xf32>
    %9 = vector.broadcast %8 : vector<1x512xf32> to vector<8x512xf32>
    %10 = arith.addf %7, %9 : vector<8x512xf32>
    %cst_11 = arith.constant 0.000000e+00 : f32
    %11 = vector.broadcast %cst_11 : f32 to vector<8x512xf32>
    %12 = arith.maximumf %10, %11 : vector<8x512xf32>
    %13 = arith.truncf %12 : vector<8x512xf32> to vector<8x512xbf16>
    %c0_12 = arith.constant 0 : index
    %c0_13 = arith.constant 0 : index
    %14 = vector.load %arg4[%c0_12, %c0_13] : memref<512x512xbf16, #tpu.memory_space<vmem>>, vector<512x512xbf16>
    %cst_14 = arith.constant dense<0.000000e+00> : vector<8x512xf32>
    %15 = tpu.matmul %13, %14, %cst_14 {dimension_numbers = #tpu.dot_dimension_numbers<[1], [0], [0], [1], [0, 0, 1, 1], [], []>} : vector<8x512xbf16>, vector<512x512xbf16>, vector<8x512xf32> -> vector<8x512xf32>
    %c0_15 = arith.constant 0 : index
    %c0_16 = arith.constant 0 : index
    %16 = vector.load %arg5[%c0_15, %c0_16] : memref<1x512xf32, #tpu.memory_space<vmem>>, vector<1x512xf32>
    %17 = vector.broadcast %16 : vector<1x512xf32> to vector<8x512xf32>
    %18 = arith.addf %15, %17 : vector<8x512xf32>
    %cst_17 = arith.constant 0.000000e+00 : f32
    %19 = vector.broadcast %cst_17 : f32 to vector<8x512xf32>
    %20 = arith.maximumf %18, %19 : vector<8x512xf32>
    %21 = arith.truncf %20 : vector<8x512xf32> to vector<8x512xbf16>
    %c0_18 = arith.constant 0 : index
    %c0_19 = arith.constant 0 : index
    %22 = vector.load %arg6[%c0_18, %c0_19] : memref<512x128xbf16, #tpu.memory_space<vmem>>, vector<512x128xbf16>
    %cst_20 = arith.constant dense<0.000000e+00> : vector<8x128xf32>
    %23 = tpu.matmul %21, %22, %cst_20 {dimension_numbers = #tpu.dot_dimension_numbers<[1], [0], [0], [1], [0, 0, 1, 1], [], []>} : vector<8x512xbf16>, vector<512x128xbf16>, vector<8x128xf32> -> vector<8x128xf32>
    %c0_21 = arith.constant 0 : index
    %c0_22 = arith.constant 0 : index
    %24 = vector.load %arg7[%c0_21, %c0_22] : memref<1x128xf32, #tpu.memory_space<vmem>>, vector<1x128xf32>
    %25 = vector.broadcast %24 : vector<1x128xf32> to vector<8x128xf32>
    %26 = arith.addf %23, %25 : vector<8x128xf32>
    %27 = math.tanh %26 : vector<8x128xf32>
    %c0_23 = arith.constant 0 : index
    %c0_24 = arith.constant 0 : index
    %28 = vector.load %arg8[%c0_23, %c0_24] : memref<8x128xf32, #tpu.memory_space<vmem>>, vector<8x128xf32>
    tpu.vector_store %arg8[%c0_23, %c0_24], %27 {strides = array<i32>} : memref<8x128xf32, #tpu.memory_space<vmem>>, vector<8x128xf32>,
    return
  }
  func.func @transform_0(%arg0: i32) -> (i32, i32) {
    %c0_i32 = arith.constant 0 : i32
    %c0_i32_0 = arith.constant 0 : i32
    return %arg0, %c0_i32 : i32, i32
  }
  func.func @transform_1(%arg0: i32) -> (i32, i32) {
    %c0_i32 = arith.constant 0 : i32
    %c0_i32_0 = arith.constant 0 : i32
    %c0_i32_1 = arith.constant 0 : i32
    return %c0_i32, %c0_i32_0 : i32, i32
  }
  func.func @transform_2(%arg0: i32) -> (i32, i32) {
    %c0_i32 = arith.constant 0 : i32
    %c0_i32_0 = arith.constant 0 : i32
    %c0_i32_1 = arith.constant 0 : i32
    return %c0_i32, %c0_i32_0 : i32, i32
  }
  func.func @transform_3(%arg0: i32) -> (i32, i32) {
    %c0_i32 = arith.constant 0 : i32
    %c0_i32_0 = arith.constant 0 : i32
    %c0_i32_1 = arith.constant 0 : i32
    return %c0_i32, %c0_i32_0 : i32, i32
  }
  func.func @transform_4(%arg0: i32) -> (i32, i32) {
    %c0_i32 = arith.constant 0 : i32
    %c0_i32_0 = arith.constant 0 : i32
    %c0_i32_1 = arith.constant 0 : i32
    return %c0_i32, %c0_i32_0 : i32, i32
  }
  func.func @transform_5(%arg0: i32) -> (i32, i32) {
    %c0_i32 = arith.constant 0 : i32
    %c0_i32_0 = arith.constant 0 : i32
    %c0_i32_1 = arith.constant 0 : i32
    return %c0_i32, %c0_i32_0 : i32, i32
  }
  func.func @transform_6(%arg0: i32) -> (i32, i32) {
    %c0_i32 = arith.constant 0 : i32
    %c0_i32_0 = arith.constant 0 : i32
    %c0_i32_1 = arith.constant 0 : i32
    return %c0_i32, %c0_i32_0 : i32, i32
  }
  func.func @transform_7(%arg0: i32) -> (i32, i32) {
    %c0_i32 = arith.constant 0 : i32
    %c0_i32_0 = arith.constant 0 : i32
    return %arg0, %c0_i32 : i32, i32
  }
}

</mosaic_0001>

<llo_original>
// kernel: actor_forward.1
$region0: #{actor_forward.1}
  #allocation0 [shape = 'u32[]', space=smem, size = 0x4, offset = 0x4, fixed_abs, tag = 'smem constant byte address 0x4 - core index']
  #allocation1 [shape = 'u32[72,128]{1,0:T(1,128)}', space=vmem, size = 0x9000, scoped, tag = 'internal scratch']
  #allocation2 [shape = 'bf16[8,384]{1,0:T(8,128)(2,1)}', space=vmem, size = 0x1800, scoped, tag = 'scratch operand']
  %s0 = inlined_call_operand.vmem [shape: f32[16,259], index: 0, kind: input, shape index: {}]
  %s1 = inlined_call_operand.hbm [shape: bf16[384,512], index: 1, kind: input, shape index: {}]
  %s2 = inlined_call_operand.vmem [shape: f32[1,512], index: 2, kind: input, shape index: {}]
  %s3 = inlined_call_operand.hbm [shape: bf16[512,512], index: 3, kind: input, shape index: {}]
  %s4 = inlined_call_operand.vmem [shape: f32[1,512], index: 4, kind: input, shape index: {}]
  %s5 = inlined_call_operand.hbm [shape: bf16[512,128], index: 5, kind: input, shape index: {}]
  %s6 = inlined_call_operand.vmem [shape: f32[1,128], index: 6, kind: input, shape index: {}]
  %s7 = inlined_call_operand.vmem [shape: f32[16,128], index: 7, kind: output, shape index: {}]
  %s8 = sld [smem:[#allocation0]]
  $region73: #{actor_forward.1} parent=0
    _
  %s10 = ssub.s32 1, %s8
  %s11 = scalar_select 0, %s10, %s8
  $region1: #{actor_forward.1} parent=0
    #allocation3 [shape = 'u8[393216]{0}', space=vmem, size = 0x60000, scoped, tag = 'input window, operand 1, single buffered']
    #allocation4 [shape = 's32[2]{0}', space=sflag, size = 0x8, scoped, tag = 'scoped memory for actor_forward.1']
    #allocation5 [shape = 'u8[524288]{0}', space=vmem, size = 0x80000, scoped, tag = 'input window, operand 3, single buffered']
    #allocation6 [shape = 's32[1]{0}', space=sflag, size = 0x4, scoped, tag = 'scoped memory for actor_forward.1']
    #allocation7 [shape = 'u8[131072]{0}', space=vmem, size = 0x20000, scoped, tag = 'input window, operand 5, single buffered']
    %12 = vsyncpa [#allocation4], 0
    %13 = vsyncpa [#allocation6], 0
    loop: start=0, step=1, limit=4
    $region2: #{actor_forward.1} parent=1 // loop_pre_header
      _
    $region3: #{actor_forward.1} parent=1 // loop_header
      %s15 = sphi 0, %s19
      %p16 = scmp.ge.s32.totalorder %s15, 4
      %s25 = sphi 0, %s27
      %s28 = sphi 0, %s25
      %s29 = sphi 0, %s28
      %s45 = sphi 0, %s29
      %s49 = sphi 0, %s49
      %s51 = sphi 0, %s49
      %s52 = sphi 0, %s51
      %s66 = sphi 0, %s52
      %s70 = sphi 0, %s70
      %s72 = sphi 0, %s70
      %s73 = sphi 0, %s72
      %s87 = sphi 0, %s73
      %s91 = sphi 0, %s91
      %s93 = sphi 0, %s91
      %s94 = sphi 0, %s93
      %s108 = sphi 0, %s94
      %s112 = sphi 0, %s112
      %s114 = sphi 0, %s112
      %s115 = sphi 0, %s114
      %s129 = sphi 0, %s115
      %s133 = sphi 0, %s133
      %s135 = sphi 0, %s133
      %s136 = sphi 0, %s135
      %s150 = sphi 0, %s136
      %s154 = sphi 0, %s154
      %s156 = sphi 0, %s154
      %s157 = sphi 0, %s156
      %s171 = sphi 0, %s157
      %s177 = sphi 0, %s179
      %s180 = sphi 0, %s177
      %s181 = sphi 0, %s180
      %s197 = sphi 0, %s181
    $region4: #{actor_forward.1} parent=1 // loop_header_branch
      %18 = sbr.rel (%p16) target = $region8
    $region5: #{actor_forward.1} parent=1 // loop_body
      %s20 = ssub.s32 %s15, 1
      %s21 = ssub.s32 %s15, 2
      %s22 = sadd.s32 %s15, 1
      %s23 = ssub.s32 %s15, %s22
      %p24 = scmp.eq.s32.totalorder %s23, 0
      %s26 = sadd.s32 %s25, 1
      %s27 = scalar_select %p24, %s25, %s26
      %p30 = pneg %p24
      %p31 = scmp.eq.s32.totalorder %s15, 1
      %p32 = por %p30, %p31
      %p33 = scmp.ne.s32.totalorder %s25, %s28
      %p34 = scmp.eq.s32.totalorder %s15, 0
      %p35 = por %p33, %p34
      %p36 = scmp.ne.s32.totalorder %s25, %s28
      %p37 = scmp.eq.s32.totalorder %s20, 1
      %p38 = por %p36, %p37
      %p39 = scmp.ne.s32.totalorder %s28, %s29
      %p40 = scmp.eq.s32.totalorder %s20, 0
      %p41 = por %p39, %p40
      %p42 = scmp.ne.s32.totalorder %s28, %s29
      %p43 = scmp.eq.s32.totalorder %s21, 1
      %p44 = por %p42, %p43
      %p46 = scmp.ne.s32.totalorder %s29, %s45
      %p47 = scmp.eq.s32.totalorder %s21, 0
      %p48 = por %p46, %p47
      %s50 = sadd.s32 %s49, 1
      %p53 = scmp.eq.s32.totalorder %s15, 1
      %p54 = scmp.ne.s32.totalorder %s49, %s51
      %p55 = scmp.eq.s32.totalorder %s15, 0
      %p56 = por %p54, %p55
      %p57 = scmp.ne.s32.totalorder %s49, %s51
      %p58 = scmp.eq.s32.totalorder %s20, 1
      %p59 = por %p57, %p58
      %p60 = scmp.ne.s32.totalorder %s51, %s52
      %p61 = scmp.eq.s32.totalorder %s20, 0
      %p62 = por %p60, %p61
      %p63 = scmp.ne.s32.totalorder %s51, %s52
      %p64 = scmp.eq.s32.totalorder %s21, 1
      %p65 = por %p63, %p64
      %p67 = scmp.ne.s32.totalorder %s52, %s66
      %p68 = scmp.eq.s32.totalorder %s21, 0
      %p69 = por %p67, %p68
      %s71 = sadd.s32 %s70, 1
      %p74 = scmp.eq.s32.totalorder %s15, 1
      %p75 = scmp.ne.s32.totalorder %s70, %s72
      %p76 = scmp.eq.s32.totalorder %s15, 0
      %p77 = por %p75, %p76
      %p78 = scmp.ne.s32.totalorder %s70, %s72
      %p79 = scmp.eq.s32.totalorder %s20, 1
      %p80 = por %p78, %p79
      %p81 = scmp.ne.s32.totalorder %s72, %s73
      %p82 = scmp.eq.s32.totalorder %s20, 0
      %p83 = por %p81, %p82
      %p84 = scmp.ne.s32.totalorder %s72, %s73
      %p85 = scmp.eq.s32.totalorder %s21, 1
      %p86 = por %p84, %p85
      %p88 = scmp.ne.s32.totalorder %s73, %s87
      %p89 = scmp.eq.s32.totalorder %s21, 0
      %p90 = por %p88, %p89
      %s92 = sadd.s32 %s91, 1
      %p95 = scmp.eq.s32.totalorder %s15, 1
      %p96 = scmp.ne.s32.totalorder %s91, %s93
      %p97 = scmp.eq.s32.totalorder %s15, 0
      %p98 = por %p96, %p97
      %p99 = scmp.ne.s32.totalorder %s91, %s93
      %p100 = scmp.eq.s32.totalorder %s20, 1
      %p101 = por %p99, %p100
      %p102 = scmp.ne.s32.totalorder %s93, %s94
      %p103 = scmp.eq.s32.totalorder %s20, 0
      %p104 = por %p102, %p103
      %p105 = scmp.ne.s32.totalorder %s93, %s94
      %p106 = scmp.eq.s32.totalorder %s21, 1
      %p107 = por %p105, %p106
      %p109 = scmp.ne.s32.totalorder %s94, %s108
      %p110 = scmp.eq.s32.totalorder %s21, 0
      %p111 = por %p109, %p110
      %s113 = sadd.s32 %s112, 1
      %p116 = scmp.eq.s32.totalorder %s15, 1
      %p117 = scmp.ne.s32.totalorder %s112, %s114
      %p118 = scmp.eq.s32.totalorder %s15, 0
      %p119 = por %p117, %p118
      %p120 = scmp.ne.s32.totalorder %s112, %s114
      %p121 = scmp.eq.s32.totalorder %s20, 1
      %p122 = por %p120, %p121
      %p123 = scmp.ne.s32.totalorder %s114, %s115
      %p124 = scmp.eq.s32.totalorder %s20, 0
      %p125 = por %p123, %p124
      %p126 = scmp.ne.s32.totalorder %s114, %s115
      %p127 = scmp.eq.s32.totalorder %s21, 1
      %p128 = por %p126, %p127
      %p130 = scmp.ne.s32.totalorder %s115, %s129
      %p131 = scmp.eq.s32.totalorder %s21, 0
      %p132 = por %p130, %p131
      %s134 = sadd.s32 %s133, 1
      %p137 = scmp.eq.s32.totalorder %s15, 1
      %p138 = scmp.ne.s32.totalorder %s133, %s135
      %p139 = scmp.eq.s32.totalorder %s15, 0
      %p140 = por %p138, %p139
      %p141 = scmp.ne.s32.totalorder %s133, %s135
      %p142 = scmp.eq.s32.totalorder %s20, 1
      %p143 = por %p141, %p142
      %p144 = scmp.ne.s32.totalorder %s135, %s136
      %p145 = scmp.eq.s32.totalorder %s20, 0
      %p146 = por %p144, %p145
      %p147 = scmp.ne.s32.totalorder %s135, %s136
      %p148 = scmp.eq.s32.totalorder %s21, 1
      %p149 = por %p147, %p148
      %p151 = scmp.ne.s32.totalorder %s136, %s150
      %p152 = scmp.eq.s32.totalorder %s21, 0
      %p153 = por %p151, %p152
      %s155 = sadd.s32 %s154, 1
      %p158 = scmp.eq.s32.totalorder %s15, 1
      %p159 = scmp.ne.s32.totalorder %s154, %s156
      %p160 = scmp.eq.s32.totalorder %s15, 0
      %p161 = por %p159, %p160
      %p162 = scmp.ne.s32.totalorder %s154, %s156
      %p163 = scmp.eq.s32.totalorder %s20, 1
      %p164 = por %p162, %p163
      %p165 = scmp.ne.s32.totalorder %s156, %s157
      %p166 = scmp.eq.s32.totalorder %s20, 0
      %p167 = por %p165, %p166
      %p168 = scmp.ne.s32.totalorder %s156, %s157
      %p169 = scmp.eq.s32.totalorder %s21, 1
      %p170 = por %p168, %p169
      %p172 = scmp.ne.s32.totalorder %s157, %s171
      %p173 = scmp.eq.s32.totalorder %s21, 0
      %p174 = por %p172, %p173
      %s175 = ssub.s32 %s15, %s22
      %p176 = scmp.eq.s32.totalorder %s175, 0
      %s178 = sadd.s32 %s177, 1
      %s179 = scalar_select %p176, %s177, %s178
      %p182 = pneg %p176
      %p183 = scmp.eq.s32.totalorder %s15, 1
      %p184 = por %p182, %p183
      %p185 = scmp.ne.s32.totalorder %s177, %s180
      %p186 = scmp.eq.s32.totalorder %s15, 0
      %p187 = por %p185, %p186
      %p188 = scmp.ne.s32.totalorder %s177, %s180
      %p189 = scmp.eq.s32.totalorder %s20, 1
      %p190 = por %p188, %p189
      %p191 = scmp.ne.s32.totalorder %s180, %s181
      %p192 = scmp.eq.s32.totalorder %s20, 0
      %p193 = por %p191, %p192
      %p194 = scmp.ne.s32.totalorder %s180, %s181
      %p195 = scmp.eq.s32.totalorder %s21, 1
      %p196 = por %p194, %p195
      %p198 = scmp.ne.s32.totalorder %s181, %s197
      %p199 = scmp.eq.s32.totalorder %s21, 0
      %p200 = por %p198, %p199
      %p201 = scmp.le.s32.totalorder 1, %s15
      %p202 = scmp.lt.s32.totalorder %s15, 3
      %p203 = pnand %p201, %p202
      %p204 = pneg %p203
      // Predicated region
      $region9: #{actor_forward.1} parent=5 // pred_check
        _
      $region10: #{actor_forward.1} parent=5 // pred_check_branch
        %206 = sbr.rel (%p203) target = $region12
      $region11: #{actor_forward.1} parent=5 // pred_region
        %s207 = ssub.s32 %s15, 1
        // Predicated region
        $region13: #{actor_forward.1} parent=11 // pred_check
          %p208 = pneg %p62
        $region14: #{actor_forward.1} parent=11 // pred_check_branch
          %210 = sbr.rel (%p208) target = $region16
        $region15: #{actor_forward.1} parent=11 // pred_region
          %212 = vsyncadd [#allocation4], 0
          %s213 = sshll.u32 %s1, 4
          %s214 = int_to_ptr.hbm [resolvable:$true] %s213
          %s215 = sshll.u32 [#allocation3], 4
          %s216 = int_to_ptr.vmem [resolvable:$true] %s215
          %221 = dma.hbm_to_vmem [thread:$0]  %s214, 12288, %s216, [#allocation4], 256, 256, 16
        $region16: #{actor_forward.1} parent=11 // pred_fallthru
          _
        // Predicated region
        $region17: #{actor_forward.1} parent=11 // pred_check
          %p222 = pneg %p83
        $region18: #{actor_forward.1} parent=11 // pred_check_branch
          %224 = sbr.rel (%p222) target = $region20
        $region19: #{actor_forward.1} parent=11 // pred_region
          _
        $region20: #{actor_forward.1} parent=11 // pred_fallthru
          _
        // Predicated region
        $region21: #{actor_forward.1} parent=11 // pred_check
          %p225 = pneg %p104
        $region22: #{actor_forward.1} parent=11 // pred_check_branch
          %227 = sbr.rel (%p225) target = $region24
        $region23: #{actor_forward.1} parent=11 // pred_region
          %229 = vsyncadd [#allocation6], 0
          %s230 = sshll.u32 %s3, 4
          %s231 = int_to_ptr.hbm [resolvable:$true] %s230
          %s232 = sshll.u32 [#allocation5], 4
          %s233 = int_to_ptr.vmem [resolvable:$true] %s232
          %238 = dma.hbm_to_vmem [thread:$0]  %s231, 16384, %s233, [#allocation6], 256, 256, 16
        $region24: #{actor_forward.1} parent=11 // pred_fallthru
          _
        // Predicated region
        $region25: #{actor_forward.1} parent=11 // pred_check
          %p239 = pneg %p125
        $region26: #{actor_forward.1} parent=11 // pred_check_branch
          %241 = sbr.rel (%p239) target = $region28
        $region27: #{actor_forward.1} parent=11 // pred_region
          _
        $region28: #{actor_forward.1} parent=11 // pred_fallthru
          _
        // Predicated region
        $region29: #{actor_forward.1} parent=11 // pred_check
          %p242 = pneg %p146
        $region30: #{actor_forward.1} parent=11 // pred_check_branch
          %244 = sbr.rel (%p242) target = $region32
        $region31: #{actor_forward.1} parent=11 // pred_region
          %246 = vsyncadd [#allocation6], 0
          %s247 = sshll.u32 %s5, 4
          %s248 = int_to_ptr.hbm [resolvable:$true] %s247
          %s249 = sshll.u32 [#allocation7], 4
          %s250 = int_to_ptr.vmem [resolvable:$true] %s249
          %255 = dma.hbm_to_vmem [thread:$0]  %s248, 4096, %s250, [#allocation6], 64, 64, 4
        $region32: #{actor_forward.1} parent=11 // pred_fallthru
          _
        // Predicated region
        $region33: #{actor_forward.1} parent=11 // pred_check
          %p256 = pneg %p167
        $region34: #{actor_forward.1} parent=11 // pred_check_branch
          %258 = sbr.rel (%p256) target = $region36
        $region35: #{actor_forward.1} parent=11 // pred_region
          _
        $region36: #{actor_forward.1} parent=11 // pred_fallthru
          _
      $region12: #{actor_forward.1} parent=5 // pred_fallthru
        _
      %p259 = scmp.lt.s32.totalorder %s15, 2
      // Predicated region
      $region37: #{actor_forward.1} parent=5 // pred_check
        %p260 = pneg %p259
      $region38: #{actor_forward.1} parent=5 // pred_check_branch
        %262 = sbr.rel (%p260) target = $region40
      $region39: #{actor_forward.1} parent=5 // pred_region
        // Predicated region
        $region41: #{actor_forward.1} parent=39 // pred_check
          %p263 = pneg %p35
        $region42: #{actor_forward.1} parent=39 // pred_check_branch
          %265 = sbr.rel (%p263) target = $region44
        $region43: #{actor_forward.1} parent=39 // pred_region
          %p266 = scmp.lt.s32.totalorder %s15, 1
          %s267 = scalar_select %p266, %s15, 1
          %s268 = smul.addr %s267, 3
          %s269 = smul.addr %s268, 8
          %s270 = scalar_lea.vmem %s0, %s269
        $region44: #{actor_forward.1} parent=39 // pred_fallthru
          _
      $region40: #{actor_forward.1} parent=5 // pred_fallthru
        _
      %p271 = scmp.le.s32.totalorder 1, %s15
      %p272 = scmp.lt.s32.totalorder %s15, 3
      %p273 = pnand %p271, %p272
      %p274 = pneg %p273
      // Predicated region
      $region45: #{actor_forward.1} parent=5 // pred_check
        _
      $region46: #{actor_forward.1} parent=5 // pred_check_branch
        %276 = sbr.rel (%p273) target = $region48
      $region47: #{actor_forward.1} parent=5 // pred_region
        %s277 = ssub.s32 %s15, 1
        // Predicated region
        $region49: #{actor_forward.1} parent=47 // pred_check
          %p278 = pneg %p62
        $region50: #{actor_forward.1} parent=47 // pred_check_branch
          %280 = sbr.rel (%p278) target = $region52
        $region51: #{actor_forward.1} parent=47 // pred_region
          %282 = dma.done [#allocation4], 12288
        $region52: #{actor_forward.1} parent=47 // pred_fallthru
          _
        // Predicated region
        $region53: #{actor_forward.1} parent=47 // pred_check
          %p283 = pneg %p104
        $region54: #{actor_forward.1} parent=47 // pred_check_branch
          %285 = sbr.rel (%p283) target = $region56
        $region55: #{actor_forward.1} parent=47 // pred_region
          %287 = dma.done [#allocation6], 16384
        $region56: #{actor_forward.1} parent=47 // pred_fallthru
          _
        // Predicated region
        $region57: #{actor_forward.1} parent=47 // pred_check
          %p288 = pneg %p146
        $region58: #{actor_forward.1} parent=47 // pred_check_branch
          %290 = sbr.rel (%p288) target = $region60
        $region59: #{actor_forward.1} parent=47 // pred_region
          %292 = dma.done [#allocation6], 4096
        $region60: #{actor_forward.1} parent=47 // pred_fallthru
          _
        %p293 = scmp.lt.s32.totalorder %s20, 1
        %s294 = scalar_select %p293, %s20, 1
        %s295 = smul.addr %s294, 3
        %s296 = smul.addr %s295, 8
        %s297 = scalar_lea.vmem %s0, %s296
        %p298 = pneg %p41
        %p299 = pneg %p38
        %p300 = pneg %p62
        %p301 = pneg %p59
        %p302 = pneg %p83
        %p303 = pneg %p80
        %p304 = pneg %p104
        %p305 = pneg %p101
        %p306 = pneg %p125
        %p307 = pneg %p122
        %p308 = pneg %p146
        %p309 = pneg %p143
        %p310 = pneg %p167
        %p311 = pneg %p164
        %p312 = pneg %p193
        %p313 = pneg %p190
        %p314 = scmp.lt.s32.totalorder %s20, 1
        %s315 = scalar_select %p314, %s20, 1
        %s316 = smul.addr %s315, 8
        %s317 = scalar_lea.vmem %s7, %s316
        %p318 = scmp.lt.s32.totalorder %s20, 1
        %s319 = scalar_select %p318, %s20, 1
        %s320 = smul.addr %s319, 3
        %s321 = smul.addr %s320, 8
        %s322 = scalar_lea.vmem %s0, %s321
        %p323 = scmp.lt.s32.totalorder %s20, 1
        %s324 = scalar_select %p323, %s20, 1
        %s325 = smul.addr %s324, 8
        %s326 = scalar_lea.vmem %s7, %s325
        %v328 = vld [vmem:[%s322] sm:$0xff]
        %v329 = vld [vmem:[%s322 + $0x8] sm:$0xff]
        %v330 = vld [vmem:[%s322 + $0x10] sm:$0xff]
        %v331 = vpack.c.bf16 %v329, %v328
        %v332 = vpack.c.bf16 %v330, %v330
        %333 = vst [vmem:[#allocation2] sm:$0xff] %v331
        %vm334 = vcmask 19456
        %335 = vst.msk [vmem:[#allocation2 + $0x8] sm:$0xf] %vm334, %v332
        %vm336 = vcmask 1043480
        %337 = vst.msk [vmem:[#allocation2 + $0x8] sm:$0xf] %vm336, 0
        %v338 = vld [vmem:[#allocation2] sm:$0xff]
        %v339 = vld [vmem:[#allocation2 + $0x8] sm:$0xf]
        %v340 = vld [vmem:[#allocation3] sm:$0xff]
        %v341 = vld [vmem:[#allocation3 + $0x8] sm:$0xff]
        %v342 = vld [vmem:[#allocation3 + $0x10] sm:$0xff]
        %v343 = vld [vmem:[#allocation3 + $0x18] sm:$0xff]
        %v344 = vld [vmem:[#allocation3 + $0x20] sm:$0xff]
        %v345 = vld [vmem:[#allocation3 + $0x28] sm:$0xff]
        %v346 = vld [vmem:[#allocation3 + $0x30] sm:$0xff]
        %v347 = vld [vmem:[#allocation3 + $0x38] sm:$0xff]
        %v348 = vld [vmem:[#allocation3 + $0x40] sm:$0xff]
        %v349 = vld [vmem:[#allocation3 + $0x48] sm:$0xff]
        %v350 = vld [vmem:[#allocation3 + $0x50] sm:$0xff]
        %v351 = vld [vmem:[#allocation3 + $0x58] sm:$0xff]
        %v352 = vld [vmem:[#allocation3 + $0x60] sm:$0xff]
        %v353 = vld [vmem:[#allocation3 + $0x68] sm:$0xff]
        %v354 = vld [vmem:[#allocation3 + $0x70] sm:$0xff]
        %v355 = vld [vmem:[#allocation3 + $0x78] sm:$0xff]
        %v356 = vld [vmem:[#allocation3 + $0x80] sm:$0xff]
        %v357 = vld [vmem:[#allocation3 + $0x88] sm:$0xff]
        %v358 = vld [vmem:[#allocation3 + $0x90] sm:$0xff]
        %v359 = vld [vmem:[#allocation3 + $0x98] sm:$0xff]
        %v360 = vld [vmem:[#allocation3 + $0xa0] sm:$0xff]
        %v361 = vld [vmem:[#allocation3 + $0xa8] sm:$0xff]
        %v362 = vld [vmem:[#allocation3 + $0xb0] sm:$0xff]
        %v363 = vld [vmem:[#allocation3 + $0xb8] sm:$0xff]
        %v364 = vld [vmem:[#allocation3 + $0xc0] sm:$0xff]
        %v365 = vld [vmem:[#allocation3 + $0xc8] sm:$0xff]
        %v366 = vld [vmem:[#allocation3 + $0xd0] sm:$0xff]
        %v367 = vld [vmem:[#allocation3 + $0xd8] sm:$0xff]
        %v368 = vld [vmem:[#allocation3 + $0xe0] sm:$0xff]
        %v369 = vld [vmem:[#allocation3 + $0xe8] sm:$0xff]
        %v370 = vld [vmem:[#allocation3 + $0xf0] sm:$0xff]
        %v371 = vld [vmem:[#allocation3 + $0xf8] sm:$0xff]
        %v372 = vld [vmem:[#allocation3 + $0x100] sm:$0xff]
        %v373 = vld [vmem:[#allocation3 + $0x108] sm:$0xff]
        %v374 = vld [vmem:[#allocation3 + $0x110] sm:$0xff]
        %v375 = vld [vmem:[#allocation3 + $0x118] sm:$0xff]
        %v376 = vld [vmem:[#allocation3 + $0x120] sm:$0xff]
        %v377 = vld [vmem:[#allocation3 + $0x128] sm:$0xff]
        %v378 = vld [vmem:[#allocation3 + $0x130] sm:$0xff]
        %v379 = vld [vmem:[#allocation3 + $0x138] sm:$0xff]
        %v380 = vld [vmem:[#allocation3 + $0x140] sm:$0xff]
        %v381 = vld [vmem:[#allocation3 + $0x148] sm:$0xff]
        %v382 = vld [vmem:[#allocation3 + $0x150] sm:$0xff]
        %v383 = vld [vmem:[#allocation3 + $0x158] sm:$0xff]
        %v384 = vld [vmem:[#allocation3 + $0x160] sm:$0xff]
        %v385 = vld [vmem:[#allocation3 + $0x168] sm:$0xff]
        %v386 = vld [vmem:[#allocation3 + $0x170] sm:$0xff]
        %v387 = vld [vmem:[#allocation3 + $0x178] sm:$0xff]
        %v388 = vld [vmem:[#allocation3 + $0x180] sm:$0xff]
        %v389 = vld [vmem:[#allocation3 + $0x188] sm:$0xff]
        %v390 = vld [vmem:[#allocation3 + $0x190] sm:$0xff]
        %v391 = vld [vmem:[#allocation3 + $0x198] sm:$0xff]
        %v392 = vld [vmem:[#allocation3 + $0x1a0] sm:$0xff]
        %v393 = vld [vmem:[#allocation3 + $0x1a8] sm:$0xff]
        %v394 = vld [vmem:[#allocation3 + $0x1b0] sm:$0xff]
        %v395 = vld [vmem:[#allocation3 + $0x1b8] sm:$0xff]
        %v396 = vld [vmem:[#allocation3 + $0x1c0] sm:$0xff]
        %v397 = vld [vmem:[#allocation3 + $0x1c8] sm:$0xff]
        %v398 = vld [vmem:[#allocation3 + $0x1d0] sm:$0xff]
        %v399 = vld [vmem:[#allocation3 + $0x1d8] sm:$0xff]
        %v400 = vld [vmem:[#allocation3 + $0x1e0] sm:$0xff]
        %v401 = vld [vmem:[#allocation3 + $0x1e8] sm:$0xff]
        %v402 = vld [vmem:[#allocation3 + $0x1f0] sm:$0xff]
        %v403 = vld [vmem:[#allocation3 + $0x1f8] sm:$0xff]
        %v404 = vld [vmem:[#allocation3 + $0x200] sm:$0xff]
        %v405 = vld [vmem:[#allocation3 + $0x208] sm:$0xff]
        %v406 = vld [vmem:[#allocation3 + $0x210] sm:$0xff]
        %v407 = vld [vmem:[#allocation3 + $0x218] sm:$0xff]
        %v408 = vld [vmem:[#allocation3 + $0x220] sm:$0xff]
        %v409 = vld [vmem:[#allocation3 + $0x228] sm:$0xff]
        %v410 = vld [vmem:[#allocation3 + $0x230] sm:$0xff]
        %v411 = vld [vmem:[#allocation3 + $0x238] sm:$0xff]
        %v412 = vld [vmem:[#allocation3 + $0x240] sm:$0xff]
        %v413 = vld [vmem:[#allocation3 + $0x248] sm:$0xff]
        %v414 = vld [vmem:[#allocation3 + $0x250] sm:$0xff]
        %v415 = vld [vmem:[#allocation3 + $0x258] sm:$0xff]
        %v416 = vld [vmem:[#allocation3 + $0x260] sm:$0xff]
        %v417 = vld [vmem:[#allocation3 + $0x268] sm:$0xff]
        %v418 = vld [vmem:[#allocation3 + $0x270] sm:$0xff]
        %v419 = vld [vmem:[#allocation3 + $0x278] sm:$0xff]
        %v420 = vld [vmem:[#allocation3 + $0x280] sm:$0xff]
        %v421 = vld [vmem:[#allocation3 + $0x288] sm:$0xff]
        %v422 = vld [vmem:[#allocation3 + $0x290] sm:$0xff]
        %v423 = vld [vmem:[#allocation3 + $0x298] sm:$0xff]
        %v424 = vld [vmem:[#allocation3 + $0x2a0] sm:$0xff]
        %v425 = vld [vmem:[#allocation3 + $0x2a8] sm:$0xff]
        %v426 = vld [vmem:[#allocation3 + $0x2b0] sm:$0xff]
        %v427 = vld [vmem:[#allocation3 + $0x2b8] sm:$0xff]
        %v428 = vld [vmem:[#allocation3 + $0x2c0] sm:$0xff]
        %v429 = vld [vmem:[#allocation3 + $0x2c8] sm:$0xff]
        %v430 = vld [vmem:[#allocation3 + $0x2d0] sm:$0xff]
        %v431 = vld [vmem:[#allocation3 + $0x2d8] sm:$0xff]
        %v432 = vld [vmem:[#allocation3 + $0x2e0] sm:$0xff]
        %v433 = vld [vmem:[#allocation3 + $0x2e8] sm:$0xff]
        %v434 = vld [vmem:[#allocation3 + $0x2f0] sm:$0xff]
        %v435 = vld [vmem:[#allocation3 + $0x2f8] sm:$0xff]
        %v436 = vld [vmem:[%s2] sm:$0xf]
        %v438 = vperm.slane %v436, 0
        %v439 = vperm.slane %v436, 1
        %v440 = vperm.slane %v436, 2
        %v441 = vperm.slane %v436, 3
        %v448 = vunpack.c.l.b16 %v338
        %v449 = vunpack.c.h.b16 %v338
        %v450 = vunpack.c.l.b16 %v339
        %v451 = vpack.c.b16 %v448, %v448
        %v452 = vpack.c.b16 %v449, %v449
        %v453 = vpack.c.b16 %v450, %v450
        %v553 = vunpack.c.l.b16 %v340
        %v554 = vunpack.c.h.b16 %v340
        %v555 = vunpack.c.l.b16 %v341
        %v556 = vunpack.c.h.b16 %v341
        %v557 = vunpack.c.l.b16 %v342
        %v558 = vunpack.c.h.b16 %v342
        %v559 = vunpack.c.l.b16 %v343
        %v560 = vunpack.c.h.b16 %v343
        %v561 = vunpack.c.l.b16 %v344
        %v562 = vunpack.c.h.b16 %v344
        %v563 = vunpack.c.l.b16 %v345
        %v564 = vunpack.c.h.b16 %v345
        %v565 = vunpack.c.l.b16 %v346
        %v566 = vunpack.c.h.b16 %v346
        %v567 = vunpack.c.l.b16 %v347
        %v568 = vunpack.c.h.b16 %v347
        %v569 = vunpack.c.l.b16 %v348
        %v570 = vunpack.c.h.b16 %v348
        %v571 = vunpack.c.l.b16 %v349
        %v572 = vunpack.c.h.b16 %v349
        %v573 = vunpack.c.l.b16 %v350
        %v574 = vunpack.c.h.b16 %v350
        %v575 = vunpack.c.l.b16 %v351
        %v576 = vunpack.c.h.b16 %v351
        %v577 = vunpack.c.l.b16 %v352
        %v578 = vunpack.c.h.b16 %v352
        %v579 = vunpack.c.l.b16 %v353
        %v580 = vunpack.c.h.b16 %v353
        %v581 = vunpack.c.l.b16 %v354
        %v582 = vunpack.c.h.b16 %v354
        %v583 = vunpack.c.l.b16 %v355
        %v584 = vunpack.c.h.b16 %v355
        %v585 = vunpack.c.l.b16 %v356
        %v586 = vunpack.c.h.b16 %v356
        %v587 = vunpack.c.l.b16 %v357
        %v588 = vunpack.c.h.b16 %v357
        %v589 = vunpack.c.l.b16 %v358
        %v590 = vunpack.c.h.b16 %v358
        %v591 = vunpack.c.l.b16 %v359
        %v592 = vunpack.c.h.b16 %v359
        %v593 = vunpack.c.l.b16 %v360
        %v594 = vunpack.c.h.b16 %v360
        %v595 = vunpack.c.l.b16 %v361
        %v596 = vunpack.c.h.b16 %v361
        %v597 = vunpack.c.l.b16 %v362
        %v598 = vunpack.c.h.b16 %v362
        %v599 = vunpack.c.l.b16 %v363
        %v600 = vunpack.c.h.b16 %v363
        %v601 = vunpack.c.l.b16 %v364
        %v602 = vunpack.c.h.b16 %v364
        %v603 = vunpack.c.l.b16 %v365
        %v604 = vunpack.c.h.b16 %v365
        %v605 = vunpack.c.l.b16 %v366
        %v606 = vunpack.c.h.b16 %v366
        %v607 = vunpack.c.l.b16 %v367
        %v608 = vunpack.c.h.b16 %v367
        %v609 = vunpack.c.l.b16 %v368
        %v610 = vunpack.c.h.b16 %v368
        %v611 = vunpack.c.l.b16 %v369
        %v612 = vunpack.c.h.b16 %v369
        %v613 = vunpack.c.l.b16 %v370
        %v614 = vunpack.c.h.b16 %v370
        %v615 = vunpack.c.l.b16 %v371
        %v616 = vunpack.c.h.b16 %v371
        %v617 = vunpack.c.l.b16 %v372
        %v618 = vunpack.c.h.b16 %v372
        %v619 = vunpack.c.l.b16 %v373
        %v620 = vunpack.c.h.b16 %v373
        %v621 = vunpack.c.l.b16 %v374
        %v622 = vunpack.c.h.b16 %v374
        %v623 = vunpack.c.l.b16 %v375
        %v624 = vunpack.c.h.b16 %v375
        %v625 = vunpack.c.l.b16 %v376
        %v626 = vunpack.c.h.b16 %v376
        %v627 = vunpack.c.l.b16 %v377
        %v628 = vunpack.c.h.b16 %v377
        %v629 = vunpack.c.l.b16 %v378
        %v630 = vunpack.c.h.b16 %v378
        %v631 = vunpack.c.l.b16 %v379
        %v632 = vunpack.c.h.b16 %v379
        %v633 = vunpack.c.l.b16 %v380
        %v634 = vunpack.c.h.b16 %v380
        %v635 = vunpack.c.l.b16 %v381
        %v636 = vunpack.c.h.b16 %v381
        %v637 = vunpack.c.l.b16 %v382
        %v638 = vunpack.c.h.b16 %v382
        %v639 = vunpack.c.l.b16 %v383
        %v640 = vunpack.c.h.b16 %v383
        %v641 = vunpack.c.l.b16 %v384
        %v642 = vunpack.c.h.b16 %v384
        %v643 = vunpack.c.l.b16 %v385
        %v644 = vunpack.c.h.b16 %v385
        %v645 = vunpack.c.l.b16 %v386
        %v646 = vunpack.c.h.b16 %v386
        %v647 = vunpack.c.l.b16 %v387
        %v648 = vunpack.c.h.b16 %v387
        %v649 = vunpack.c.l.b16 %v388
        %v650 = vunpack.c.h.b16 %v388
        %v651 = vunpack.c.l.b16 %v389
        %v652 = vunpack.c.h.b16 %v389
        %v653 = vunpack.c.l.b16 %v390
        %v654 = vunpack.c.h.b16 %v390
        %v655 = vunpack.c.l.b16 %v391
        %v656 = vunpack.c.h.b16 %v391
        %v657 = vunpack.c.l.b16 %v392
        %v658 = vunpack.c.h.b16 %v392
        %v659 = vunpack.c.l.b16 %v393
        %v660 = vunpack.c.h.b16 %v393
        %v661 = vunpack.c.l.b16 %v394
        %v662 = vunpack.c.h.b16 %v394
        %v663 = vunpack.c.l.b16 %v395
        %v664 = vunpack.c.h.b16 %v395
        %v665 = vunpack.c.l.b16 %v396
        %v666 = vunpack.c.h.b16 %v396
        %v667 = vunpack.c.l.b16 %v397
        %v668 = vunpack.c.h.b16 %v397
        %v669 = vunpack.c.l.b16 %v398
        %v670 = vunpack.c.h.b16 %v398
        %v671 = vunpack.c.l.b16 %v399
        %v672 = vunpack.c.h.b16 %v399
        %v673 = vunpack.c.l.b16 %v400
        %v674 = vunpack.c.h.b16 %v400
        %v675 = vunpack.c.l.b16 %v401
        %v676 = vunpack.c.h.b16 %v401
        %v677 = vunpack.c.l.b16 %v402
        %v678 = vunpack.c.h.b16 %v402
        %v679 = vunpack.c.l.b16 %v403
        %v680 = vunpack.c.h.b16 %v403
        %v681 = vunpack.c.l.b16 %v404
        %v682 = vunpack.c.h.b16 %v404
        %v683 = vunpack.c.l.b16 %v405
        %v684 = vunpack.c.h.b16 %v405
        %v685 = vunpack.c.l.b16 %v406
        %v686 = vunpack.c.h.b16 %v406
        %v687 = vunpack.c.l.b16 %v407
        %v688 = vunpack.c.h.b16 %v407
        %v689 = vunpack.c.l.b16 %v408
        %v690 = vunpack.c.h.b16 %v408
        %v691 = vunpack.c.l.b16 %v409
        %v692 = vunpack.c.h.b16 %v409
        %v693 = vunpack.c.l.b16 %v410
        %v694 = vunpack.c.h.b16 %v410
        %v695 = vunpack.c.l.b16 %v411
        %v696 = vunpack.c.h.b16 %v411
        %v697 = vunpack.c.l.b16 %v412
        %v698 = vunpack.c.h.b16 %v412
        %v699 = vunpack.c.l.b16 %v413
        %v700 = vunpack.c.h.b16 %v413
        %v701 = vunpack.c.l.b16 %v414
        %v702 = vunpack.c.h.b16 %v414
        %v703 = vunpack.c.l.b16 %v415
        %v704 = vunpack.c.h.b16 %v415
        %v705 = vunpack.c.l.b16 %v416
        %v706 = vunpack.c.h.b16 %v416
        %v707 = vunpack.c.l.b16 %v417
        %v708 = vunpack.c.h.b16 %v417
        %v709 = vunpack.c.l.b16 %v418
        %v710 = vunpack.c.h.b16 %v418
        %v711 = vunpack.c.l.b16 %v419
        %v712 = vunpack.c.h.b16 %v419
        %v713 = vunpack.c.l.b16 %v420
        %v714 = vunpack.c.h.b16 %v420
        %v715 = vunpack.c.l.b16 %v421
        %v716 = vunpack.c.h.b16 %v421
        %v717 = vunpack.c.l.b16 %v422
        %v718 = vunpack.c.h.b16 %v422
        %v719 = vunpack.c.l.b16 %v423
        %v720 = vunpack.c.h.b16 %v423
        %v721 = vunpack.c.l.b16 %v424
        %v722 = vunpack.c.h.b16 %v424
        %v723 = vunpack.c.l.b16 %v425
        %v724 = vunpack.c.h.b16 %v425
        %v725 = vunpack.c.l.b16 %v426
        %v726 = vunpack.c.h.b16 %v426
        %v727 = vunpack.c.l.b16 %v427
        %v728 = vunpack.c.h.b16 %v427
        %v729 = vunpack.c.l.b16 %v428
        %v730 = vunpack.c.h.b16 %v428
        %v731 = vunpack.c.l.b16 %v429
        %v732 = vunpack.c.h.b16 %v429
        %v733 = vunpack.c.l.b16 %v430
        %v734 = vunpack.c.h.b16 %v430
        %v735 = vunpack.c.l.b16 %v431
        %v736 = vunpack.c.h.b16 %v431
        %v737 = vunpack.c.l.b16 %v432
        %v738 = vunpack.c.h.b16 %v432
        %v739 = vunpack.c.l.b16 %v433
        %v740 = vunpack.c.h.b16 %v433
        %v741 = vunpack.c.l.b16 %v434
        %v742 = vunpack.c.h.b16 %v434
        %v743 = vunpack.c.l.b16 %v435
        %v744 = vunpack.c.h.b16 %v435
        %v745 = vpack.c.b16 %v557, %v553
        %v746 = vpack.c.b16 %v558, %v554
        %v747 = vpack.c.b16 %v559, %v555
        %v748 = vpack.c.b16 %v560, %v556
        %v749 = vpack.c.b16 %v565, %v561
        %v750 = vpack.c.b16 %v566, %v562
        %v751 = vpack.c.b16 %v567, %v563
        %v752 = vpack.c.b16 %v568, %v564
        %v753 = vpack.c.b16 %v573, %v569
        %v754 = vpack.c.b16 %v574, %v570
        %v755 = vpack.c.b16 %v575, %v571
        %v756 = vpack.c.b16 %v576, %v572
        %v757 = vpack.c.b16 %v581, %v577
        %v758 = vpack.c.b16 %v582, %v578
        %v759 = vpack.c.b16 %v583, %v579
        %v760 = vpack.c.b16 %v584, %v580
        %v761 = vpack.c.b16 %v589, %v585
        %v762 = vpack.c.b16 %v590, %v586
        %v763 = vpack.c.b16 %v591, %v587
        %v764 = vpack.c.b16 %v592, %v588
        %v765 = vpack.c.b16 %v597, %v593
        %v766 = vpack.c.b16 %v598, %v594
        %v767 = vpack.c.b16 %v599, %v595
        %v768 = vpack.c.b16 %v600, %v596
        %v769 = vpack.c.b16 %v605, %v601
        %v770 = vpack.c.b16 %v606, %v602
        %v771 = vpack.c.b16 %v607, %v603
        %v772 = vpack.c.b16 %v608, %v604
        %v773 = vpack.c.b16 %v613, %v609
        %v774 = vpack.c.b16 %v614, %v610
        %v775 = vpack.c.b16 %v615, %v611
        %v776 = vpack.c.b16 %v616, %v612
        %v777 = vpack.c.b16 %v621, %v617
        %v778 = vpack.c.b16 %v622, %v618
        %v779 = vpack.c.b16 %v623, %v619
        %v780 = vpack.c.b16 %v624, %v620
        %v781 = vpack.c.b16 %v629, %v625
        %v782 = vpack.c.b16 %v630, %v626
        %v783 = vpack.c.b16 %v631, %v627
        %v784 = vpack.c.b16 %v632, %v628
        %v785 = vpack.c.b16 %v637, %v633
        %v786 = vpack.c.b16 %v638, %v634
        %v787 = vpack.c.b16 %v639, %v635
        %v788 = vpack.c.b16 %v640, %v636
        %v789 = vpack.c.b16 %v645, %v641
        %v790 = vpack.c.b16 %v646, %v642
        %v791 = vpack.c.b16 %v647, %v643
        %v792 = vpack.c.b16 %v648, %v644
        %v793 = vpack.c.b16 %v653, %v649
        %v794 = vpack.c.b16 %v654, %v650
        %v795 = vpack.c.b16 %v655, %v651
        %v796 = vpack.c.b16 %v656, %v652
        %v797 = vpack.c.b16 %v661, %v657
        %v798 = vpack.c.b16 %v662, %v658
        %v799 = vpack.c.b16 %v663, %v659
        %v800 = vpack.c.b16 %v664, %v660
        %v801 = vpack.c.b16 %v669, %v665
        %v802 = vpack.c.b16 %v670, %v666
        %v803 = vpack.c.b16 %v671, %v667
        %v804 = vpack.c.b16 %v672, %v668
        %v805 = vpack.c.b16 %v677, %v673
        %v806 = vpack.c.b16 %v678, %v674
        %v807 = vpack.c.b16 %v679, %v675
        %v808 = vpack.c.b16 %v680, %v676
        %v809 = vpack.c.b16 %v685, %v681
        %v810 = vpack.c.b16 %v686, %v682
        %v811 = vpack.c.b16 %v687, %v683
        %v812 = vpack.c.b16 %v688, %v684
        %v813 = vpack.c.b16 %v693, %v689
        %v814 = vpack.c.b16 %v694, %v690
        %v815 = vpack.c.b16 %v695, %v691
        %v816 = vpack.c.b16 %v696, %v692
        %v817 = vpack.c.b16 %v701, %v697
        %v818 = vpack.c.b16 %v702, %v698
        %v819 = vpack.c.b16 %v703, %v699
        %v820 = vpack.c.b16 %v704, %v700
        %v821 = vpack.c.b16 %v709, %v705
        %v822 = vpack.c.b16 %v710, %v706
        %v823 = vpack.c.b16 %v711, %v707
        %v824 = vpack.c.b16 %v712, %v708
        %v825 = vpack.c.b16 %v717, %v713
        %v826 = vpack.c.b16 %v718, %v714
        %v827 = vpack.c.b16 %v719, %v715
        %v828 = vpack.c.b16 %v720, %v716
        %v829 = vpack.c.b16 %v725, %v721
        %v830 = vpack.c.b16 %v726, %v722
        %v831 = vpack.c.b16 %v727, %v723
        %v832 = vpack.c.b16 %v728, %v724
        %v833 = vpack.c.b16 %v733, %v729
        %v834 = vpack.c.b16 %v734, %v730
        %v835 = vpack.c.b16 %v735, %v731
        %v836 = vpack.c.b16 %v736, %v732
        %v837 = vpack.c.b16 %v741, %v737
        %v838 = vpack.c.b16 %v742, %v738
        %v839 = vpack.c.b16 %v743, %v739
        %v840 = vpack.c.b16 %v744, %v740
        %937 = vmatpush.bf16.msra.mxu0 %v773
        %938 = vmatpush.bf16.msra.mxu0 %v769
        %939 = vmatpush.bf16.msra.mxu0 %v765
        %940 = vmatpush.bf16.msra.mxu0 %v761
        %941 = vmatpush.bf16.msra.mxu0 %v757
        %942 = vmatpush.bf16.msra.mxu0 %v753
        %943 = vmatpush.bf16.msra.mxu0 %v749
        %944 = vmatpush.bf16.msra.mxu0 %v745
        %945 = vmatmul.bf16.gmra.mxu0 %v451
        %v946 = vpop.f32.mrf.mxu0
        %v947 = vadd.f32 %v438, %v946
        %v948 = vpop.f32.mrf.mxu0
        %949 = vdwg.mxu0
        %950 = vmatpush.bf16.msra.mxu0 %v805
        %951 = vmatpush.bf16.msra.mxu0 %v801
        %952 = vmatpush.bf16.msra.mxu0 %v797
        %953 = vmatpush.bf16.msra.mxu0 %v793
        %954 = vmatpush.bf16.msra.mxu0 %v789
        %955 = vmatpush.bf16.msra.mxu0 %v785
        %956 = vmatpush.bf16.msra.mxu0 %v781
        %957 = vmatpush.bf16.msra.mxu0 %v777
        %958 = vmatmul.bf16.gmra.mxu0 %v452
        %v959 = vpop.f32.mrf.mxu0
        %v960 = vadd.f32 %v947, %v959
        %v961 = vpop.f32.mrf.mxu0
        %962 = vdwg.mxu0
        %963 = vmatpush.bf16.msra.mxu0 %v837
        %964 = vmatpush.bf16.msra.mxu0 %v833
        %965 = vmatpush.bf16.msra.mxu0 %v829
        %966 = vmatpush.bf16.msra.mxu0 %v825
        %967 = vmatpush.bf16.msra.mxu0 %v821
        %968 = vmatpush.bf16.msra.mxu0 %v817
        %969 = vmatpush.bf16.msra.mxu0 %v813
        %970 = vmatpush.bf16.msra.mxu0 %v809
        %971 = vmatmul.bf16.gmra.mxu0 %v453
        %v972 = vpop.f32.mrf.mxu0
        %v973 = vadd.f32 %v960, %v972
        %v974 = vpop.f32.mrf.mxu0
        %975 = vdwg.mxu0
        %976 = vmatpush.bf16.msra.mxu0 %v774
        %977 = vmatpush.bf16.msra.mxu0 %v770
        %978 = vmatpush.bf16.msra.mxu0 %v766
        %979 = vmatpush.bf16.msra.mxu0 %v762
        %980 = vmatpush.bf16.msra.mxu0 %v758
        %981 = vmatpush.bf16.msra.mxu0 %v754
        %982 = vmatpush.bf16.msra.mxu0 %v750
        %983 = vmatpush.bf16.msra.mxu0 %v746
        %984 = vmatmul.bf16.gmra.mxu0 %v451
        %v985 = vpop.f32.mrf.mxu0
        %v986 = vadd.f32 %v439, %v985
        %v987 = vpop.f32.mrf.mxu0
        %988 = vdwg.mxu0
        %989 = vmatpush.bf16.msra.mxu0 %v806
        %990 = vmatpush.bf16.msra.mxu0 %v802
        %991 = vmatpush.bf16.msra.mxu0 %v798
        %992 = vmatpush.bf16.msra.mxu0 %v794
        %993 = vmatpush.bf16.msra.mxu0 %v790
        %994 = vmatpush.bf16.msra.mxu0 %v786
        %995 = vmatpush.bf16.msra.mxu0 %v782
        %996 = vmatpush.bf16.msra.mxu0 %v778
        %997 = vmatmul.bf16.gmra.mxu0 %v452
        %v998 = vpop.f32.mrf.mxu0
        %v999 = vadd.f32 %v986, %v998
        %v1000 = vpop.f32.mrf.mxu0
        %1001 = vdwg.mxu0
        %1002 = vmatpush.bf16.msra.mxu0 %v838
        %1003 = vmatpush.bf16.msra.mxu0 %v834
        %1004 = vmatpush.bf16.msra.mxu0 %v830
        %1005 = vmatpush.bf16.msra.mxu0 %v826
        %1006 = vmatpush.bf16.msra.mxu0 %v822
        %1007 = vmatpush.bf16.msra.mxu0 %v818
        %1008 = vmatpush.bf16.msra.mxu0 %v814
        %1009 = vmatpush.bf16.msra.mxu0 %v810
        %1010 = vmatmul.bf16.gmra.mxu0 %v453
        %v1011 = vpop.f32.mrf.mxu0
        %v1012 = vadd.f32 %v999, %v1011
        %v1013 = vpop.f32.mrf.mxu0
        %1014 = vdwg.mxu0
        %1015 = vmatpush.bf16.msra.mxu0 %v775
        %1016 = vmatpush.bf16.msra.mxu0 %v771
        %1017 = vmatpush.bf16.msra.mxu0 %v767
        %1018 = vmatpush.bf16.msra.mxu0 %v763
        %1019 = vmatpush.bf16.msra.mxu0 %v759
        %1020 = vmatpush.bf16.msra.mxu0 %v755
        %1021 = vmatpush.bf16.msra.mxu0 %v751
        %1022 = vmatpush.bf16.msra.mxu0 %v747
        %1023 = vmatmul.bf16.gmra.mxu0 %v451
        %v1024 = vpop.f32.mrf.mxu0
        %v1025 = vadd.f32 %v440, %v1024
        %v1026 = vpop.f32.mrf.mxu0
        %1027 = vdwg.mxu0
        %1028 = vmatpush.bf16.msra.mxu0 %v807
        %1029 = vmatpush.bf16.msra.mxu0 %v803
        %1030 = vmatpush.bf16.msra.mxu0 %v799
        %1031 = vmatpush.bf16.msra.mxu0 %v795
        %1032 = vmatpush.bf16.msra.mxu0 %v791
        %1033 = vmatpush.bf16.msra.mxu0 %v787
        %1034 = vmatpush.bf16.msra.mxu0 %v783
        %1035 = vmatpush.bf16.msra.mxu0 %v779
        %1036 = vmatmul.bf16.gmra.mxu0 %v452
        %v1037 = vpop.f32.mrf.mxu0
        %v1038 = vadd.f32 %v1025, %v1037
        %v1039 = vpop.f32.mrf.mxu0
        %1040 = vdwg.mxu0
        %1041 = vmatpush.bf16.msra.mxu0 %v839
        %1042 = vmatpush.bf16.msra.mxu0 %v835
        %1043 = vmatpush.bf16.msra.mxu0 %v831
        %1044 = vmatpush.bf16.msra.mxu0 %v827
        %1045 = vmatpush.bf16.msra.mxu0 %v823
        %1046 = vmatpush.bf16.msra.mxu0 %v819
        %1047 = vmatpush.bf16.msra.mxu0 %v815
        %1048 = vmatpush.bf16.msra.mxu0 %v811
        %1049 = vmatmul.bf16.gmra.mxu0 %v453
        %v1050 = vpop.f32.mrf.mxu0
        %v1051 = vadd.f32 %v1038, %v1050
        %v1052 = vpop.f32.mrf.mxu0
        %1053 = vdwg.mxu0
        %1054 = vmatpush.bf16.msra.mxu0 %v776
        %1055 = vmatpush.bf16.msra.mxu0 %v772
        %1056 = vmatpush.bf16.msra.mxu0 %v768
        %1057 = vmatpush.bf16.msra.mxu0 %v764
        %1058 = vmatpush.bf16.msra.mxu0 %v760
        %1059 = vmatpush.bf16.msra.mxu0 %v756
        %1060 = vmatpush.bf16.msra.mxu0 %v752
        %1061 = vmatpush.bf16.msra.mxu0 %v748
        %1062 = vmatmul.bf16.gmra.mxu0 %v451
        %v1063 = vpop.f32.mrf.mxu0
        %v1064 = vadd.f32 %v441, %v1063
        %v1065 = vpop.f32.mrf.mxu0
        %1066 = vdwg.mxu0
        %1067 = vmatpush.bf16.msra.mxu0 %v808
        %1068 = vmatpush.bf16.msra.mxu0 %v804
        %1069 = vmatpush.bf16.msra.mxu0 %v800
        %1070 = vmatpush.bf16.msra.mxu0 %v796
        %1071 = vmatpush.bf16.msra.mxu0 %v792
        %1072 = vmatpush.bf16.msra.mxu0 %v788
        %1073 = vmatpush.bf16.msra.mxu0 %v784
        %1074 = vmatpush.bf16.msra.mxu0 %v780
        %1075 = vmatmul.bf16.gmra.mxu0 %v452
        %v1076 = vpop.f32.mrf.mxu0
        %v1077 = vadd.f32 %v1064, %v1076
        %v1078 = vpop.f32.mrf.mxu0
        %1079 = vdwg.mxu0
        %1080 = vmatpush.bf16.msra.mxu0 %v840
        %1081 = vmatpush.bf16.msra.mxu0 %v836
        %1082 = vmatpush.bf16.msra.mxu0 %v832
        %1083 = vmatpush.bf16.msra.mxu0 %v828
        %1084 = vmatpush.bf16.msra.mxu0 %v824
        %1085 = vmatpush.bf16.msra.mxu0 %v820
        %1086 = vmatpush.bf16.msra.mxu0 %v816
        %1087 = vmatpush.bf16.msra.mxu0 %v812
        %1088 = vmatmul.bf16.gmra.mxu0 %v453
        %v1089 = vpop.f32.mrf.mxu0
        %v1090 = vadd.f32 %v1077, %v1089
        %v1091 = vpop.f32.mrf.mxu0
        %1092 = vdwg.mxu0
        %v1093 = vmax.f32 %v973, 0.0
        %v1094 = vmax.f32 %v1012, 0.0
        %v1095 = vmax.f32 %v1051, 0.0
        %v1096 = vmax.f32 %v1090, 0.0
        %v1097 = vpack.c.bf16 %v1093, %v1093
        %v1098 = vpack.c.bf16 %v1094, %v1094
        %v1099 = vpack.c.bf16 %v1095, %v1095
        %v1100 = vpack.c.bf16 %v1096, %v1096
        %v1101 = vld [vmem:[#allocation5] sm:$0xff]
        %v1102 = vld [vmem:[#allocation5 + $0x8] sm:$0xff]
        %v1103 = vld [vmem:[#allocation5 + $0x10] sm:$0xff]
        %v1104 = vld [vmem:[#allocation5 + $0x18] sm:$0xff]
        %v1105 = vld [vmem:[#allocation5 + $0x20] sm:$0xff]
        %v1106 = vld [vmem:[#allocation5 + $0x28] sm:$0xff]
        %v1107 = vld [vmem:[#allocation5 + $0x30] sm:$0xff]
        %v1108 = vld [vmem:[#allocation5 + $0x38] sm:$0xff]
        %v1109 = vld [vmem:[#allocation5 + $0x40] sm:$0xff]
        %v1110 = vld [vmem:[#allocation5 + $0x48] sm:$0xff]
        %v1111 = vld [vmem:[#allocation5 + $0x50] sm:$0xff]
        %v1112 = vld [vmem:[#allocation5 + $0x58] sm:$0xff]
        %v1113 = vld [vmem:[#allocation5 + $0x60] sm:$0xff]
        %v1114 = vld [vmem:[#allocation5 + $0x68] sm:$0xff]
        %v1115 = vld [vmem:[#allocation5 + $0x70] sm:$0xff]
        %v1116 = vld [vmem:[#allocation5 + $0x78] sm:$0xff]
        %v1117 = vld [vmem:[#allocation5 + $0x80] sm:$0xff]
        %v1118 = vld [vmem:[#allocation5 + $0x88] sm:$0xff]
        %v1119 = vld [vmem:[#allocation5 + $0x90] sm:$0xff]
        %v1120 = vld [vmem:[#allocation5 + $0x98] sm:$0xff]
        %v1121 = vld [vmem:[#allocation5 + $0xa0] sm:$0xff]
        %v1122 = vld [vmem:[#allocation5 + $0xa8] sm:$0xff]
        %v1123 = vld [vmem:[#allocation5 + $0xb0] sm:$0xff]
        %v1124 = vld [vmem:[#allocation5 + $0xb8] sm:$0xff]
        %v1125 = vld [vmem:[#allocation5 + $0xc0] sm:$0xff]
        %v1126 = vld [vmem:[#allocation5 + $0xc8] sm:$0xff]
        %v1127 = vld [vmem:[#allocation5 + $0xd0] sm:$0xff]
        %v1128 = vld [vmem:[#allocation5 + $0xd8] sm:$0xff]
        %v1129 = vld [vmem:[#allocation5 + $0xe0] sm:$0xff]
        %v1130 = vld [vmem:[#allocation5 + $0xe8] sm:$0xff]
        %v1131 = vld [vmem:[#allocation5 + $0xf0] sm:$0xff]
        %v1132 = vld [vmem:[#allocation5 + $0xf8] sm:$0xff]
        %v1133 = vld [vmem:[#allocation5 + $0x100] sm:$0xff]
        %v1134 = vld [vmem:[#allocation5 + $0x108] sm:$0xff]
        %v1135 = vld [vmem:[#allocation5 + $0x110] sm:$0xff]
        %v1136 = vld [vmem:[#allocation5 + $0x118] sm:$0xff]
        %v1137 = vld [vmem:[#allocation5 + $0x120] sm:$0xff]
        %v1138 = vld [vmem:[#allocation5 + $0x128] sm:$0xff]
        %v1139 = vld [vmem:[#allocation5 + $0x130] sm:$0xff]
        %v1140 = vld [vmem:[#allocation5 + $0x138] sm:$0xff]
        %v1141 = vld [vmem:[#allocation5 + $0x140] sm:$0xff]
        %v1142 = vld [vmem:[#allocation5 + $0x148] sm:$0xff]
        %v1143 = vld [vmem:[#allocation5 + $0x150] sm:$0xff]
        %v1144 = vld [vmem:[#allocation5 + $0x158] sm:$0xff]
        %v1145 = vld [vmem:[#allocation5 + $0x160] sm:$0xff]
        %v1146 = vld [vmem:[#allocation5 + $0x168] sm:$0xff]
        %v1147 = vld [vmem:[#allocation5 + $0x170] sm:$0xff]
        %v1148 = vld [vmem:[#allocation5 + $0x178] sm:$0xff]
        %v1149 = vld [vmem:[#allocation5 + $0x180] sm:$0xff]
        %v1150 = vld [vmem:[#allocation5 + $0x188] sm:$0xff]
        %v1151 = vld [vmem:[#allocation5 + $0x190] sm:$0xff]
        %v1152 = vld [vmem:[#allocation5 + $0x198] sm:$0xff]
        %v1153 = vld [vmem:[#allocation5 + $0x1a0] sm:$0xff]
        %v1154 = vld [vmem:[#allocation5 + $0x1a8] sm:$0xff]
        %v1155 = vld [vmem:[#allocation5 + $0x1b0] sm:$0xff]
        %v1156 = vld [vmem:[#allocation5 + $0x1b8] sm:$0xff]
        %v1157 = vld [vmem:[#allocation5 + $0x1c0] sm:$0xff]
        %v1158 = vld [vmem:[#allocation5 + $0x1c8] sm:$0xff]
        %v1159 = vld [vmem:[#allocation5 + $0x1d0] sm:$0xff]
        %v1160 = vld [vmem:[#allocation5 + $0x1d8] sm:$0xff]
        %v1161 = vld [vmem:[#allocation5 + $0x1e0] sm:$0xff]
        %v1162 = vld [vmem:[#allocation5 + $0x1e8] sm:$0xff]
        %v1163 = vld [vmem:[#allocation5 + $0x1f0] sm:$0xff]
        %v1164 = vld [vmem:[#allocation5 + $0x1f8] sm:$0xff]
        %v1165 = vld [vmem:[#allocation5 + $0x200] sm:$0xff]
        %v1166 = vld [vmem:[#allocation5 + $0x208] sm:$0xff]
        %v1167 = vld [vmem:[#allocation5 + $0x210] sm:$0xff]
        %v1168 = vld [vmem:[#allocation5 + $0x218] sm:$0xff]
        %v1169 = vld [vmem:[#allocation5 + $0x220] sm:$0xff]
        %v1170 = vld [vmem:[#allocation5 + $0x228] sm:$0xff]
        %v1171 = vld [vmem:[#allocation5 + $0x230] sm:$0xff]
        %v1172 = vld [vmem:[#allocation5 + $0x238] sm:$0xff]
        %v1173 = vld [vmem:[#allocation5 + $0x240] sm:$0xff]
        %v1174 = vld [vmem:[#allocation5 + $0x248] sm:$0xff]
        %v1175 = vld [vmem:[#allocation5 + $0x250] sm:$0xff]
        %v1176 = vld [vmem:[#allocation5 + $0x258] sm:$0xff]
        %v1177 = vld [vmem:[#allocation5 + $0x260] sm:$0xff]
        %v1178 = vld [vmem:[#allocation5 + $0x268] sm:$0xff]
        %v1179 = vld [vmem:[#allocation5 + $0x270] sm:$0xff]
        %v1180 = vld [vmem:[#allocation5 + $0x278] sm:$0xff]
        %v1181 = vld [vmem:[#allocation5 + $0x280] sm:$0xff]
        %v1182 = vld [vmem:[#allocation5 + $0x288] sm:$0xff]
        %v1183 = vld [vmem:[#allocation5 + $0x290] sm:$0xff]
        %v1184 = vld [vmem:[#allocation5 + $0x298] sm:$0xff]
        %v1185 = vld [vmem:[#allocation5 + $0x2a0] sm:$0xff]
        %v1186 = vld [vmem:[#allocation5 + $0x2a8] sm:$0xff]
        %v1187 = vld [vmem:[#allocation5 + $0x2b0] sm:$0xff]
        %v1188 = vld [vmem:[#allocation5 + $0x2b8] sm:$0xff]
        %v1189 = vld [vmem:[#allocation5 + $0x2c0] sm:$0xff]
        %v1190 = vld [vmem:[#allocation5 + $0x2c8] sm:$0xff]
        %v1191 = vld [vmem:[#allocation5 + $0x2d0] sm:$0xff]
        %v1192 = vld [vmem:[#allocation5 + $0x2d8] sm:$0xff]
        %v1193 = vld [vmem:[#allocation5 + $0x2e0] sm:$0xff]
        %v1194 = vld [vmem:[#allocation5 + $0x2e8] sm:$0xff]
        %v1195 = vld [vmem:[#allocation5 + $0x2f0] sm:$0xff]
        %v1196 = vld [vmem:[#allocation5 + $0x2f8] sm:$0xff]
        %v1197 = vld [vmem:[#allocation5 + $0x300] sm:$0xff]
        %v1198 = vld [vmem:[#allocation5 + $0x308] sm:$0xff]
        %v1199 = vld [vmem:[#allocation5 + $0x310] sm:$0xff]
        %v1200 = vld [vmem:[#allocation5 + $0x318] sm:$0xff]
        %v1201 = vld [vmem:[#allocation5 + $0x320] sm:$0xff]
        %v1202 = vld [vmem:[#allocation5 + $0x328] sm:$0xff]
        %v1203 = vld [vmem:[#allocation5 + $0x330] sm:$0xff]
        %v1204 = vld [vmem:[#allocation5 + $0x338] sm:$0xff]
        %v1205 = vld [vmem:[#allocation5 + $0x340] sm:$0xff]
        %v1206 = vld [vmem:[#allocation5 + $0x348] sm:$0xff]
        %v1207 = vld [vmem:[#allocation5 + $0x350] sm:$0xff]
        %v1208 = vld [vmem:[#allocation5 + $0x358] sm:$0xff]
        %v1209 = vld [vmem:[#allocation5 + $0x360] sm:$0xff]
        %v1210 = vld [vmem:[#allocation5 + $0x368] sm:$0xff]
        %v1211 = vld [vmem:[#allocation5 + $0x370] sm:$0xff]
        %v1212 = vld [vmem:[#allocation5 + $0x378] sm:$0xff]
        %v1213 = vld [vmem:[#allocation5 + $0x380] sm:$0xff]
        %v1214 = vld [vmem:[#allocation5 + $0x388] sm:$0xff]
        %v1215 = vld [vmem:[#allocation5 + $0x390] sm:$0xff]
        %v1216 = vld [vmem:[#allocation5 + $0x398] sm:$0xff]
        %v1217 = vld [vmem:[#allocation5 + $0x3a0] sm:$0xff]
        %v1218 = vld [vmem:[#allocation5 + $0x3a8] sm:$0xff]
        %v1219 = vld [vmem:[#allocation5 + $0x3b0] sm:$0xff]
        %v1220 = vld [vmem:[#allocation5 + $0x3b8] sm:$0xff]
        %v1221 = vld [vmem:[#allocation5 + $0x3c0] sm:$0xff]
        %v1222 = vld [vmem:[#allocation5 + $0x3c8] sm:$0xff]
        %v1223 = vld [vmem:[#allocation5 + $0x3d0] sm:$0xff]
        %v1224 = vld [vmem:[#allocation5 + $0x3d8] sm:$0xff]
        %v1225 = vld [vmem:[#allocation5 + $0x3e0] sm:$0xff]
        %v1226 = vld [vmem:[#allocation5 + $0x3e8] sm:$0xff]
        %v1227 = vld [vmem:[#allocation5 + $0x3f0] sm:$0xff]
        %v1228 = vld [vmem:[#allocation5 + $0x3f8] sm:$0xff]
        %v1229 = vld [vmem:[%s4] sm:$0xf]
        %v1231 = vperm.slane %v1229, 0
        %v1232 = vperm.slane %v1229, 1
        %v1233 = vperm.slane %v1229, 2
        %v1234 = vperm.slane %v1229, 3
        %v1367 = vunpack.c.l.b16 %v1101
        %v1368 = vunpack.c.h.b16 %v1101
        %v1369 = vunpack.c.l.b16 %v1102
        %v1370 = vunpack.c.h.b16 %v1102
        %v1371 = vunpack.c.l.b16 %v1103
        %v1372 = vunpack.c.h.b16 %v1103
        %v1373 = vunpack.c.l.b16 %v1104
        %v1374 = vunpack.c.h.b16 %v1104
        %v1375 = vunpack.c.l.b16 %v1105
        %v1376 = vunpack.c.h.b16 %v1105
        %v1377 = vunpack.c.l.b16 %v1106
        %v1378 = vunpack.c.h.b16 %v1106
        %v1379 = vunpack.c.l.b16 %v1107
        %v1380 = vunpack.c.h.b16 %v1107
        %v1381 = vunpack.c.l.b16 %v1108
        %v1382 = vunpack.c.h.b16 %v1108
        %v1383 = vunpack.c.l.b16 %v1109
        %v1384 = vunpack.c.h.b16 %v1109
        %v1385 = vunpack.c.l.b16 %v1110
        %v1386 = vunpack.c.h.b16 %v1110
        %v1387 = vunpack.c.l.b16 %v1111
        %v1388 = vunpack.c.h.b16 %v1111
        %v1389 = vunpack.c.l.b16 %v1112
        %v1390 = vunpack.c.h.b16 %v1112
        %v1391 = vunpack.c.l.b16 %v1113
        %v1392 = vunpack.c.h.b16 %v1113
        %v1393 = vunpack.c.l.b16 %v1114
        %v1394 = vunpack.c.h.b16 %v1114
        %v1395 = vunpack.c.l.b16 %v1115
        %v1396 = vunpack.c.h.b16 %v1115
        %v1397 = vunpack.c.l.b16 %v1116
        %v1398 = vunpack.c.h.b16 %v1116
        %v1399 = vunpack.c.l.b16 %v1117
        %v1400 = vunpack.c.h.b16 %v1117
        %v1401 = vunpack.c.l.b16 %v1118
        %v1402 = vunpack.c.h.b16 %v1118
        %v1403 = vunpack.c.l.b16 %v1119
        %v1404 = vunpack.c.h.b16 %v1119
        %v1405 = vunpack.c.l.b16 %v1120
        %v1406 = vunpack.c.h.b16 %v1120
        %v1407 = vunpack.c.l.b16 %v1121
        %v1408 = vunpack.c.h.b16 %v1121
        %v1409 = vunpack.c.l.b16 %v1122
        %v1410 = vunpack.c.h.b16 %v1122
        %v1411 = vunpack.c.l.b16 %v1123
        %v1412 = vunpack.c.h.b16 %v1123
        %v1413 = vunpack.c.l.b16 %v1124
        %v1414 = vunpack.c.h.b16 %v1124
        %v1415 = vunpack.c.l.b16 %v1125
        %v1416 = vunpack.c.h.b16 %v1125
        %v1417 = vunpack.c.l.b16 %v1126
        %v1418 = vunpack.c.h.b16 %v1126
        %v1419 = vunpack.c.l.b16 %v1127
        %v1420 = vunpack.c.h.b16 %v1127
        %v1421 = vunpack.c.l.b16 %v1128
        %v1422 = vunpack.c.h.b16 %v1128
        %v1423 = vunpack.c.l.b16 %v1129
        %v1424 = vunpack.c.h.b16 %v1129
        %v1425 = vunpack.c.l.b16 %v1130
        %v1426 = vunpack.c.h.b16 %v1130
        %v1427 = vunpack.c.l.b16 %v1131
        %v1428 = vunpack.c.h.b16 %v1131
        %v1429 = vunpack.c.l.b16 %v1132
        %v1430 = vunpack.c.h.b16 %v1132
        %v1431 = vunpack.c.l.b16 %v1133
        %v1432 = vunpack.c.h.b16 %v1133
        %v1433 = vunpack.c.l.b16 %v1134
        %v1434 = vunpack.c.h.b16 %v1134
        %v1435 = vunpack.c.l.b16 %v1135
        %v1436 = vunpack.c.h.b16 %v1135
        %v1437 = vunpack.c.l.b16 %v1136
        %v1438 = vunpack.c.h.b16 %v1136
        %v1439 = vunpack.c.l.b16 %v1137
        %v1440 = vunpack.c.h.b16 %v1137
        %v1441 = vunpack.c.l.b16 %v1138
        %v1442 = vunpack.c.h.b16 %v1138
        %v1443 = vunpack.c.l.b16 %v1139
        %v1444 = vunpack.c.h.b16 %v1139
        %v1445 = vunpack.c.l.b16 %v1140
        %v1446 = vunpack.c.h.b16 %v1140
        %v1447 = vunpack.c.l.b16 %v1141
        %v1448 = vunpack.c.h.b16 %v1141
        %v1449 = vunpack.c.l.b16 %v1142
        %v1450 = vunpack.c.h.b16 %v1142
        %v1451 = vunpack.c.l.b16 %v1143
        %v1452 = vunpack.c.h.b16 %v1143
        %v1453 = vunpack.c.l.b16 %v1144
        %v1454 = vunpack.c.h.b16 %v1144
        %v1455 = vunpack.c.l.b16 %v1145
        %v1456 = vunpack.c.h.b16 %v1145
        %v1457 = vunpack.c.l.b16 %v1146
        %v1458 = vunpack.c.h.b16 %v1146
        %v1459 = vunpack.c.l.b16 %v1147
        %v1460 = vunpack.c.h.b16 %v1147
        %v1461 = vunpack.c.l.b16 %v1148
        %v1462 = vunpack.c.h.b16 %v1148
        %v1463 = vunpack.c.l.b16 %v1149
        %v1464 = vunpack.c.h.b16 %v1149
        %v1465 = vunpack.c.l.b16 %v1150
        %v1466 = vunpack.c.h.b16 %v1150
        %v1467 = vunpack.c.l.b16 %v1151
        %v1468 = vunpack.c.h.b16 %v1151
        %v1469 = vunpack.c.l.b16 %v1152
        %v1470 = vunpack.c.h.b16 %v1152
        %v1471 = vunpack.c.l.b16 %v1153
        %v1472 = vunpack.c.h.b16 %v1153
        %v1473 = vunpack.c.l.b16 %v1154
        %v1474 = vunpack.c.h.b16 %v1154
        %v1475 = vunpack.c.l.b16 %v1155
        %v1476 = vunpack.c.h.b16 %v1155
        %v1477 = vunpack.c.l.b16 %v1156
        %v1478 = vunpack.c.h.b16 %v1156
        %v1479 = vunpack.c.l.b16 %v1157
        %v1480 = vunpack.c.h.b16 %v1157
        %v1481 = vunpack.c.l.b16 %v1158
        %v1482 = vunpack.c.h.b16 %v1158
        %v1483 = vunpack.c.l.b16 %v1159
        %v1484 = vunpack.c.h.b16 %v1159
        %v1485 = vunpack.c.l.b16 %v1160
        %v1486 = vunpack.c.h.b16 %v1160
        %v1487 = vunpack.c.l.b16 %v1161
        %v1488 = vunpack.c.h.b16 %v1161
        %v1489 = vunpack.c.l.b16 %v1162
        %v1490 = vunpack.c.h.b16 %v1162
        %v1491 = vunpack.c.l.b16 %v1163
        %v1492 = vunpack.c.h.b16 %v1163
        %v1493 = vunpack.c.l.b16 %v1164
        %v1494 = vunpack.c.h.b16 %v1164
        %v1495 = vunpack.c.l.b16 %v1165
        %v1496 = vunpack.c.h.b16 %v1165
        %v1497 = vunpack.c.l.b16 %v1166
        %v1498 = vunpack.c.h.b16 %v1166
        %v1499 = vunpack.c.l.b16 %v1167
        %v1500 = vunpack.c.h.b16 %v1167
        %v1501 = vunpack.c.l.b16 %v1168
        %v1502 = vunpack.c.h.b16 %v1168
        %v1503 = vunpack.c.l.b16 %v1169
        %v1504 = vunpack.c.h.b16 %v1169
        %v1505 = vunpack.c.l.b16 %v1170
        %v1506 = vunpack.c.h.b16 %v1170
        %v1507 = vunpack.c.l.b16 %v1171
        %v1508 = vunpack.c.h.b16 %v1171
        %v1509 = vunpack.c.l.b16 %v1172
        %v1510 = vunpack.c.h.b16 %v1172
        %v1511 = vunpack.c.l.b16 %v1173
        %v1512 = vunpack.c.h.b16 %v1173
        %v1513 = vunpack.c.l.b16 %v1174
        %v1514 = vunpack.c.h.b16 %v1174
        %v1515 = vunpack.c.l.b16 %v1175
        %v1516 = vunpack.c.h.b16 %v1175
        %v1517 = vunpack.c.l.b16 %v1176
        %v1518 = vunpack.c.h.b16 %v1176
        %v1519 = vunpack.c.l.b16 %v1177
        %v1520 = vunpack.c.h.b16 %v1177
        %v1521 = vunpack.c.l.b16 %v1178
        %v1522 = vunpack.c.h.b16 %v1178
        %v1523 = vunpack.c.l.b16 %v1179
        %v1524 = vunpack.c.h.b16 %v1179
        %v1525 = vunpack.c.l.b16 %v1180
        %v1526 = vunpack.c.h.b16 %v1180
        %v1527 = vunpack.c.l.b16 %v1181
        %v1528 = vunpack.c.h.b16 %v1181
        %v1529 = vunpack.c.l.b16 %v1182
        %v1530 = vunpack.c.h.b16 %v1182
        %v1531 = vunpack.c.l.b16 %v1183
        %v1532 = vunpack.c.h.b16 %v1183
        %v1533 = vunpack.c.l.b16 %v1184
        %v1534 = vunpack.c.h.b16 %v1184
        %v1535 = vunpack.c.l.b16 %v1185
        %v1536 = vunpack.c.h.b16 %v1185
        %v1537 = vunpack.c.l.b16 %v1186
        %v1538 = vunpack.c.h.b16 %v1186
        %v1539 = vunpack.c.l.b16 %v1187
        %v1540 = vunpack.c.h.b16 %v1187
        %v1541 = vunpack.c.l.b16 %v1188
        %v1542 = vunpack.c.h.b16 %v1188
        %v1543 = vunpack.c.l.b16 %v1189
        %v1544 = vunpack.c.h.b16 %v1189
        %v1545 = vunpack.c.l.b16 %v1190
        %v1546 = vunpack.c.h.b16 %v1190
        %v1547 = vunpack.c.l.b16 %v1191
        %v1548 = vunpack.c.h.b16 %v1191
        %v1549 = vunpack.c.l.b16 %v1192
        %v1550 = vunpack.c.h.b16 %v1192
        %v1551 = vunpack.c.l.b16 %v1193
        %v1552 = vunpack.c.h.b16 %v1193
        %v1553 = vunpack.c.l.b16 %v1194
        %v1554 = vunpack.c.h.b16 %v1194
        %v1555 = vunpack.c.l.b16 %v1195
        %v1556 = vunpack.c.h.b16 %v1195
        %v1557 = vunpack.c.l.b16 %v1196
        %v1558 = vunpack.c.h.b16 %v1196
        %v1559 = vunpack.c.l.b16 %v1197
        %v1560 = vunpack.c.h.b16 %v1197
        %v1561 = vunpack.c.l.b16 %v1198
        %v1562 = vunpack.c.h.b16 %v1198
        %v1563 = vunpack.c.l.b16 %v1199
        %v1564 = vunpack.c.h.b16 %v1199
        %v1565 = vunpack.c.l.b16 %v1200
        %v1566 = vunpack.c.h.b16 %v1200
        %v1567 = vunpack.c.l.b16 %v1201
        %v1568 = vunpack.c.h.b16 %v1201
        %v1569 = vunpack.c.l.b16 %v1202
        %v1570 = vunpack.c.h.b16 %v1202
        %v1571 = vunpack.c.l.b16 %v1203
        %v1572 = vunpack.c.h.b16 %v1203
        %v1573 = vunpack.c.l.b16 %v1204
        %v1574 = vunpack.c.h.b16 %v1204
        %v1575 = vunpack.c.l.b16 %v1205
        %v1576 = vunpack.c.h.b16 %v1205
        %v1577 = vunpack.c.l.b16 %v1206
        %v1578 = vunpack.c.h.b16 %v1206
        %v1579 = vunpack.c.l.b16 %v1207
        %v1580 = vunpack.c.h.b16 %v1207
        %v1581 = vunpack.c.l.b16 %v1208
        %v1582 = vunpack.c.h.b16 %v1208
        %v1583 = vunpack.c.l.b16 %v1209
        %v1584 = vunpack.c.h.b16 %v1209
        %v1585 = vunpack.c.l.b16 %v1210
        %v1586 = vunpack.c.h.b16 %v1210
        %v1587 = vunpack.c.l.b16 %v1211
        %v1588 = vunpack.c.h.b16 %v1211
        %v1589 = vunpack.c.l.b16 %v1212
        %v1590 = vunpack.c.h.b16 %v1212
        %v1591 = vunpack.c.l.b16 %v1213
        %v1592 = vunpack.c.h.b16 %v1213
        %v1593 = vunpack.c.l.b16 %v1214
        %v1594 = vunpack.c.h.b16 %v1214
        %v1595 = vunpack.c.l.b16 %v1215
        %v1596 = vunpack.c.h.b16 %v1215
        %v1597 = vunpack.c.l.b16 %v1216
        %v1598 = vunpack.c.h.b16 %v1216
        %v1599 = vunpack.c.l.b16 %v1217
        %v1600 = vunpack.c.h.b16 %v1217
        %v1601 = vunpack.c.l.b16 %v1218
        %v1602 = vunpack.c.h.b16 %v1218
        %v1603 = vunpack.c.l.b16 %v1219
        %v1604 = vunpack.c.h.b16 %v1219
        %v1605 = vunpack.c.l.b16 %v1220
        %v1606 = vunpack.c.h.b16 %v1220
        %v1607 = vunpack.c.l.b16 %v1221
        %v1608 = vunpack.c.h.b16 %v1221
        %v1609 = vunpack.c.l.b16 %v1222
        %v1610 = vunpack.c.h.b16 %v1222
        %v1611 = vunpack.c.l.b16 %v1223
        %v1612 = vunpack.c.h.b16 %v1223
        %v1613 = vunpack.c.l.b16 %v1224
        %v1614 = vunpack.c.h.b16 %v1224
        %v1615 = vunpack.c.l.b16 %v1225
        %v1616 = vunpack.c.h.b16 %v1225
        %v1617 = vunpack.c.l.b16 %v1226
        %v1618 = vunpack.c.h.b16 %v1226
        %v1619 = vunpack.c.l.b16 %v1227
        %v1620 = vunpack.c.h.b16 %v1227
        %v1621 = vunpack.c.l.b16 %v1228
        %v1622 = vunpack.c.h.b16 %v1228
        %v1623 = vpack.c.b16 %v1371, %v1367
        %v1624 = vpack.c.b16 %v1372, %v1368
        %v1625 = vpack.c.b16 %v1373, %v1369
        %v1626 = vpack.c.b16 %v1374, %v1370
        %v1627 = vpack.c.b16 %v1379, %v1375
        %v1628 = vpack.c.b16 %v1380, %v1376
        %v1629 = vpack.c.b16 %v1381, %v1377
        %v1630 = vpack.c.b16 %v1382, %v1378
        %v1631 = vpack.c.b16 %v1387, %v1383
        %v1632 = vpack.c.b16 %v1388, %v1384
        %v1633 = vpack.c.b16 %v1389, %v1385
        %v1634 = vpack.c.b16 %v1390, %v1386
        %v1635 = vpack.c.b16 %v1395, %v1391
        %v1636 = vpack.c.b16 %v1396, %v1392
        %v1637 = vpack.c.b16 %v1397, %v1393
        %v1638 = vpack.c.b16 %v1398, %v1394
        %v1639 = vpack.c.b16 %v1403, %v1399
        %v1640 = vpack.c.b16 %v1404, %v1400
        %v1641 = vpack.c.b16 %v1405, %v1401
        %v1642 = vpack.c.b16 %v1406, %v1402
        %v1643 = vpack.c.b16 %v1411, %v1407
        %v1644 = vpack.c.b16 %v1412, %v1408
        %v1645 = vpack.c.b16 %v1413, %v1409
        %v1646 = vpack.c.b16 %v1414, %v1410
        %v1647 = vpack.c.b16 %v1419, %v1415
        %v1648 = vpack.c.b16 %v1420, %v1416
        %v1649 = vpack.c.b16 %v1421, %v1417
        %v1650 = vpack.c.b16 %v1422, %v1418
        %v1651 = vpack.c.b16 %v1427, %v1423
        %v1652 = vpack.c.b16 %v1428, %v1424
        %v1653 = vpack.c.b16 %v1429, %v1425
        %v1654 = vpack.c.b16 %v1430, %v1426
        %v1655 = vpack.c.b16 %v1435, %v1431
        %v1656 = vpack.c.b16 %v1436, %v1432
        %v1657 = vpack.c.b16 %v1437, %v1433
        %v1658 = vpack.c.b16 %v1438, %v1434
        %v1659 = vpack.c.b16 %v1443, %v1439
        %v1660 = vpack.c.b16 %v1444, %v1440
        %v1661 = vpack.c.b16 %v1445, %v1441
        %v1662 = vpack.c.b16 %v1446, %v1442
        %v1663 = vpack.c.b16 %v1451, %v1447
        %v1664 = vpack.c.b16 %v1452, %v1448
        %v1665 = vpack.c.b16 %v1453, %v1449
        %v1666 = vpack.c.b16 %v1454, %v1450
        %v1667 = vpack.c.b16 %v1459, %v1455
        %v1668 = vpack.c.b16 %v1460, %v1456
        %v1669 = vpack.c.b16 %v1461, %v1457
        %v1670 = vpack.c.b16 %v1462, %v1458
        %v1671 = vpack.c.b16 %v1467, %v1463
        %v1672 = vpack.c.b16 %v1468, %v1464
        %v1673 = vpack.c.b16 %v1469, %v1465
        %v1674 = vpack.c.b16 %v1470, %v1466
        %v1675 = vpack.c.b16 %v1475, %v1471
        %v1676 = vpack.c.b16 %v1476, %v1472
        %v1677 = vpack.c.b16 %v1477, %v1473
        %v1678 = vpack.c.b16 %v1478, %v1474
        %v1679 = vpack.c.b16 %v1483, %v1479
        %v1680 = vpack.c.b16 %v1484, %v1480
        %v1681 = vpack.c.b16 %v1485, %v1481
        %v1682 = vpack.c.b16 %v1486, %v1482
        %v1683 = vpack.c.b16 %v1491, %v1487
        %v1684 = vpack.c.b16 %v1492, %v1488
        %v1685 = vpack.c.b16 %v1493, %v1489
        %v1686 = vpack.c.b16 %v1494, %v1490
        %v1687 = vpack.c.b16 %v1499, %v1495
        %v1688 = vpack.c.b16 %v1500, %v1496
        %v1689 = vpack.c.b16 %v1501, %v1497
        %v1690 = vpack.c.b16 %v1502, %v1498
        %v1691 = vpack.c.b16 %v1507, %v1503
        %v1692 = vpack.c.b16 %v1508, %v1504
        %v1693 = vpack.c.b16 %v1509, %v1505
        %v1694 = vpack.c.b16 %v1510, %v1506
        %v1695 = vpack.c.b16 %v1515, %v1511
        %v1696 = vpack.c.b16 %v1516, %v1512
        %v1697 = vpack.c.b16 %v1517, %v1513
        %v1698 = vpack.c.b16 %v1518, %v1514
        %v1699 = vpack.c.b16 %v1523, %v1519
        %v1700 = vpack.c.b16 %v1524, %v1520
        %v1701 = vpack.c.b16 %v1525, %v1521
        %v1702 = vpack.c.b16 %v1526, %v1522
        %v1703 = vpack.c.b16 %v1531, %v1527
        %v1704 = vpack.c.b16 %v1532, %v1528
        %v1705 = vpack.c.b16 %v1533, %v1529
        %v1706 = vpack.c.b16 %v1534, %v1530
        %v1707 = vpack.c.b16 %v1539, %v1535
        %v1708 = vpack.c.b16 %v1540, %v1536
        %v1709 = vpack.c.b16 %v1541, %v1537
        %v1710 = vpack.c.b16 %v1542, %v1538
        %v1711 = vpack.c.b16 %v1547, %v1543
        %v1712 = vpack.c.b16 %v1548, %v1544
        %v1713 = vpack.c.b16 %v1549, %v1545
        %v1714 = vpack.c.b16 %v1550, %v1546
        %v1715 = vpack.c.b16 %v1555, %v1551
        %v1716 = vpack.c.b16 %v1556, %v1552
        %v1717 = vpack.c.b16 %v1557, %v1553
        %v1718 = vpack.c.b16 %v1558, %v1554
        %v1719 = vpack.c.b16 %v1563, %v1559
        %v1720 = vpack.c.b16 %v1564, %v1560
        %v1721 = vpack.c.b16 %v1565, %v1561
        %v1722 = vpack.c.b16 %v1566, %v1562
        %v1723 = vpack.c.b16 %v1571, %v1567
        %v1724 = vpack.c.b16 %v1572, %v1568
        %v1725 = vpack.c.b16 %v1573, %v1569
        %v1726 = vpack.c.b16 %v1574, %v1570
        %v1727 = vpack.c.b16 %v1579, %v1575
        %v1728 = vpack.c.b16 %v1580, %v1576
        %v1729 = vpack.c.b16 %v1581, %v1577
        %v1730 = vpack.c.b16 %v1582, %v1578
        %v1731 = vpack.c.b16 %v1587, %v1583
        %v1732 = vpack.c.b16 %v1588, %v1584
        %v1733 = vpack.c.b16 %v1589, %v1585
        %v1734 = vpack.c.b16 %v1590, %v1586
        %v1735 = vpack.c.b16 %v1595, %v1591
        %v1736 = vpack.c.b16 %v1596, %v1592
        %v1737 = vpack.c.b16 %v1597, %v1593
        %v1738 = vpack.c.b16 %v1598, %v1594
        %v1739 = vpack.c.b16 %v1603, %v1599
        %v1740 = vpack.c.b16 %v1604, %v1600
        %v1741 = vpack.c.b16 %v1605, %v1601
        %v1742 = vpack.c.b16 %v1606, %v1602
        %v1743 = vpack.c.b16 %v1611, %v1607
        %v1744 = vpack.c.b16 %v1612, %v1608
        %v1745 = vpack.c.b16 %v1613, %v1609
        %v1746 = vpack.c.b16 %v1614, %v1610
        %v1747 = vpack.c.b16 %v1619, %v1615
        %v1748 = vpack.c.b16 %v1620, %v1616
        %v1749 = vpack.c.b16 %v1621, %v1617
        %v1750 = vpack.c.b16 %v1622, %v1618
        %1879 = vmatpush.bf16.msra.mxu0 %v1651
        %1880 = vmatpush.bf16.msra.mxu0 %v1647
        %1881 = vmatpush.bf16.msra.mxu0 %v1643
        %1882 = vmatpush.bf16.msra.mxu0 %v1639
        %1883 = vmatpush.bf16.msra.mxu0 %v1635
        %1884 = vmatpush.bf16.msra.mxu0 %v1631
        %1885 = vmatpush.bf16.msra.mxu0 %v1627
        %1886 = vmatpush.bf16.msra.mxu0 %v1623
        %1887 = vmatmul.bf16.gmra.mxu0 %v1097
        %v1888 = vpop.f32.mrf.mxu0
        %v1889 = vadd.f32 %v1231, %v1888
        %v1890 = vpop.f32.mrf.mxu0
        %1891 = vdwg.mxu0
        %1892 = vmatpush.bf16.msra.mxu0 %v1683
        %1893 = vmatpush.bf16.msra.mxu0 %v1679
        %1894 = vmatpush.bf16.msra.mxu0 %v1675
        %1895 = vmatpush.bf16.msra.mxu0 %v1671
        %1896 = vmatpush.bf16.msra.mxu0 %v1667
        %1897 = vmatpush.bf16.msra.mxu0 %v1663
        %1898 = vmatpush.bf16.msra.mxu0 %v1659
        %1899 = vmatpush.bf16.msra.mxu0 %v1655
        %1900 = vmatmul.bf16.gmra.mxu0 %v1098
        %v1901 = vpop.f32.mrf.mxu0
        %v1902 = vadd.f32 %v1889, %v1901
        %v1903 = vpop.f32.mrf.mxu0
        %1904 = vdwg.mxu0
        %1905 = vmatpush.bf16.msra.mxu0 %v1715
        %1906 = vmatpush.bf16.msra.mxu0 %v1711
        %1907 = vmatpush.bf16.msra.mxu0 %v1707
        %1908 = vmatpush.bf16.msra.mxu0 %v1703
        %1909 = vmatpush.bf16.msra.mxu0 %v1699
        %1910 = vmatpush.bf16.msra.mxu0 %v1695
        %1911 = vmatpush.bf16.msra.mxu0 %v1691
        %1912 = vmatpush.bf16.msra.mxu0 %v1687
        %1913 = vmatmul.bf16.gmra.mxu0 %v1099
        %v1914 = vpop.f32.mrf.mxu0
        %v1915 = vadd.f32 %v1902, %v1914
        %v1916 = vpop.f32.mrf.mxu0
        %1917 = vdwg.mxu0
        %1918 = vmatpush.bf16.msra.mxu0 %v1747
        %1919 = vmatpush.bf16.msra.mxu0 %v1743
        %1920 = vmatpush.bf16.msra.mxu0 %v1739
        %1921 = vmatpush.bf16.msra.mxu0 %v1735
        %1922 = vmatpush.bf16.msra.mxu0 %v1731
        %1923 = vmatpush.bf16.msra.mxu0 %v1727
        %1924 = vmatpush.bf16.msra.mxu0 %v1723
        %1925 = vmatpush.bf16.msra.mxu0 %v1719
        %1926 = vmatmul.bf16.gmra.mxu0 %v1100
        %v1927 = vpop.f32.mrf.mxu0
        %v1928 = vadd.f32 %v1915, %v1927
        %v1929 = vpop.f32.mrf.mxu0
        %1930 = vdwg.mxu0
        %1931 = vmatpush.bf16.msra.mxu0 %v1652
        %1932 = vmatpush.bf16.msra.mxu0 %v1648
        %1933 = vmatpush.bf16.msra.mxu0 %v1644
        %1934 = vmatpush.bf16.msra.mxu0 %v1640
        %1935 = vmatpush.bf16.msra.mxu0 %v1636
        %1936 = vmatpush.bf16.msra.mxu0 %v1632
        %1937 = vmatpush.bf16.msra.mxu0 %v1628
        %1938 = vmatpush.bf16.msra.mxu0 %v1624
        %1939 = vmatmul.bf16.gmra.mxu0 %v1097
        %v1940 = vpop.f32.mrf.mxu0
        %v1941 = vadd.f32 %v1232, %v1940
        %v1942 = vpop.f32.mrf.mxu0
        %1943 = vdwg.mxu0
        %1944 = vmatpush.bf16.msra.mxu0 %v1684
        %1945 = vmatpush.bf16.msra.mxu0 %v1680
        %1946 = vmatpush.bf16.msra.mxu0 %v1676
        %1947 = vmatpush.bf16.msra.mxu0 %v1672
        %1948 = vmatpush.bf16.msra.mxu0 %v1668
        %1949 = vmatpush.bf16.msra.mxu0 %v1664
        %1950 = vmatpush.bf16.msra.mxu0 %v1660
        %1951 = vmatpush.bf16.msra.mxu0 %v1656
        %1952 = vmatmul.bf16.gmra.mxu0 %v1098
        %v1953 = vpop.f32.mrf.mxu0
        %v1954 = vadd.f32 %v1941, %v1953
        %v1955 = vpop.f32.mrf.mxu0
        %1956 = vdwg.mxu0
        %1957 = vmatpush.bf16.msra.mxu0 %v1716
        %1958 = vmatpush.bf16.msra.mxu0 %v1712
        %1959 = vmatpush.bf16.msra.mxu0 %v1708
        %1960 = vmatpush.bf16.msra.mxu0 %v1704
        %1961 = vmatpush.bf16.msra.mxu0 %v1700
        %1962 = vmatpush.bf16.msra.mxu0 %v1696
        %1963 = vmatpush.bf16.msra.mxu0 %v1692
        %1964 = vmatpush.bf16.msra.mxu0 %v1688
        %1965 = vmatmul.bf16.gmra.mxu0 %v1099
        %v1966 = vpop.f32.mrf.mxu0
        %v1967 = vadd.f32 %v1954, %v1966
        %v1968 = vpop.f32.mrf.mxu0
        %1969 = vdwg.mxu0
        %1970 = vmatpush.bf16.msra.mxu0 %v1748
        %1971 = vmatpush.bf16.msra.mxu0 %v1744
        %1972 = vmatpush.bf16.msra.mxu0 %v1740
        %1973 = vmatpush.bf16.msra.mxu0 %v1736
        %1974 = vmatpush.bf16.msra.mxu0 %v1732
        %1975 = vmatpush.bf16.msra.mxu0 %v1728
        %1976 = vmatpush.bf16.msra.mxu0 %v1724
        %1977 = vmatpush.bf16.msra.mxu0 %v1720
        %1978 = vmatmul.bf16.gmra.mxu0 %v1100
        %v1979 = vpop.f32.mrf.mxu0
        %v1980 = vadd.f32 %v1967, %v1979
        %v1981 = vpop.f32.mrf.mxu0
        %1982 = vdwg.mxu0
        %1983 = vmatpush.bf16.msra.mxu0 %v1653
        %1984 = vmatpush.bf16.msra.mxu0 %v1649
        %1985 = vmatpush.bf16.msra.mxu0 %v1645
        %1986 = vmatpush.bf16.msra.mxu0 %v1641
        %1987 = vmatpush.bf16.msra.mxu0 %v1637
        %1988 = vmatpush.bf16.msra.mxu0 %v1633
        %1989 = vmatpush.bf16.msra.mxu0 %v1629
        %1990 = vmatpush.bf16.msra.mxu0 %v1625
        %1991 = vmatmul.bf16.gmra.mxu0 %v1097
        %v1992 = vpop.f32.mrf.mxu0
        %v1993 = vadd.f32 %v1233, %v1992
        %v1994 = vpop.f32.mrf.mxu0
        %1995 = vdwg.mxu0
        %1996 = vmatpush.bf16.msra.mxu0 %v1685
        %1997 = vmatpush.bf16.msra.mxu0 %v1681
        %1998 = vmatpush.bf16.msra.mxu0 %v1677
        %1999 = vmatpush.bf16.msra.mxu0 %v1673
        %2000 = vmatpush.bf16.msra.mxu0 %v1669
        %2001 = vmatpush.bf16.msra.mxu0 %v1665
        %2002 = vmatpush.bf16.msra.mxu0 %v1661
        %2003 = vmatpush.bf16.msra.mxu0 %v1657
        %2004 = vmatmul.bf16.gmra.mxu0 %v1098
        %v2005 = vpop.f32.mrf.mxu0
        %v2006 = vadd.f32 %v1993, %v2005
        %v2007 = vpop.f32.mrf.mxu0
        %2008 = vdwg.mxu0
        %2009 = vmatpush.bf16.msra.mxu0 %v1717
        %2010 = vmatpush.bf16.msra.mxu0 %v1713
        %2011 = vmatpush.bf16.msra.mxu0 %v1709
        %2012 = vmatpush.bf16.msra.mxu0 %v1705
        %2013 = vmatpush.bf16.msra.mxu0 %v1701
        %2014 = vmatpush.bf16.msra.mxu0 %v1697
        %2015 = vmatpush.bf16.msra.mxu0 %v1693
        %2016 = vmatpush.bf16.msra.mxu0 %v1689
        %2017 = vmatmul.bf16.gmra.mxu0 %v1099
        %v2018 = vpop.f32.mrf.mxu0
        %v2019 = vadd.f32 %v2006, %v2018
        %v2020 = vpop.f32.mrf.mxu0
        %2021 = vdwg.mxu0
        %2022 = vmatpush.bf16.msra.mxu0 %v1749
        %2023 = vmatpush.bf16.msra.mxu0 %v1745
        %2024 = vmatpush.bf16.msra.mxu0 %v1741
        %2025 = vmatpush.bf16.msra.mxu0 %v1737
        %2026 = vmatpush.bf16.msra.mxu0 %v1733
        %2027 = vmatpush.bf16.msra.mxu0 %v1729
        %2028 = vmatpush.bf16.msra.mxu0 %v1725
        %2029 = vmatpush.bf16.msra.mxu0 %v1721
        %2030 = vmatmul.bf16.gmra.mxu0 %v1100
        %v2031 = vpop.f32.mrf.mxu0
        %v2032 = vadd.f32 %v2019, %v2031
        %v2033 = vpop.f32.mrf.mxu0
        %2034 = vdwg.mxu0
        %2035 = vmatpush.bf16.msra.mxu0 %v1654
        %2036 = vmatpush.bf16.msra.mxu0 %v1650
        %2037 = vmatpush.bf16.msra.mxu0 %v1646
        %2038 = vmatpush.bf16.msra.mxu0 %v1642
        %2039 = vmatpush.bf16.msra.mxu0 %v1638
        %2040 = vmatpush.bf16.msra.mxu0 %v1634
        %2041 = vmatpush.bf16.msra.mxu0 %v1630
        %2042 = vmatpush.bf16.msra.mxu0 %v1626
        %2043 = vmatmul.bf16.gmra.mxu0 %v1097
        %v2044 = vpop.f32.mrf.mxu0
        %v2045 = vadd.f32 %v1234, %v2044
        %v2046 = vpop.f32.mrf.mxu0
        %2047 = vdwg.mxu0
        %2048 = vmatpush.bf16.msra.mxu0 %v1686
        %2049 = vmatpush.bf16.msra.mxu0 %v1682
        %2050 = vmatpush.bf16.msra.mxu0 %v1678
        %2051 = vmatpush.bf16.msra.mxu0 %v1674
        %2052 = vmatpush.bf16.msra.mxu0 %v1670
        %2053 = vmatpush.bf16.msra.mxu0 %v1666
        %2054 = vmatpush.bf16.msra.mxu0 %v1662
        %2055 = vmatpush.bf16.msra.mxu0 %v1658
        %2056 = vmatmul.bf16.gmra.mxu0 %v1098
        %v2057 = vpop.f32.mrf.mxu0
        %v2058 = vadd.f32 %v2045, %v2057
        %v2059 = vpop.f32.mrf.mxu0
        %2060 = vdwg.mxu0
        %2061 = vmatpush.bf16.msra.mxu0 %v1718
        %2062 = vmatpush.bf16.msra.mxu0 %v1714
        %2063 = vmatpush.bf16.msra.mxu0 %v1710
        %2064 = vmatpush.bf16.msra.mxu0 %v1706
        %2065 = vmatpush.bf16.msra.mxu0 %v1702
        %2066 = vmatpush.bf16.msra.mxu0 %v1698
        %2067 = vmatpush.bf16.msra.mxu0 %v1694
        %2068 = vmatpush.bf16.msra.mxu0 %v1690
        %2069 = vmatmul.bf16.gmra.mxu0 %v1099
        %v2070 = vpop.f32.mrf.mxu0
        %v2071 = vadd.f32 %v2058, %v2070
        %v2072 = vpop.f32.mrf.mxu0
        %2073 = vdwg.mxu0
        %2074 = vmatpush.bf16.msra.mxu0 %v1750
        %2075 = vmatpush.bf16.msra.mxu0 %v1746
        %2076 = vmatpush.bf16.msra.mxu0 %v1742
        %2077 = vmatpush.bf16.msra.mxu0 %v1738
        %2078 = vmatpush.bf16.msra.mxu0 %v1734
        %2079 = vmatpush.bf16.msra.mxu0 %v1730
        %2080 = vmatpush.bf16.msra.mxu0 %v1726
        %2081 = vmatpush.bf16.msra.mxu0 %v1722
        %2082 = vmatmul.bf16.gmra.mxu0 %v1100
        %v2083 = vpop.f32.mrf.mxu0
        %v2084 = vadd.f32 %v2071, %v2083
        %v2085 = vpop.f32.mrf.mxu0
        %2086 = vdwg.mxu0
        %v2087 = vmax.f32 %v1928, 0.0
        %v2088 = vmax.f32 %v1980, 0.0
        %v2089 = vmax.f32 %v2032, 0.0
        %v2090 = vmax.f32 %v2084, 0.0
        %v2091 = vpack.c.bf16 %v2087, %v2087
        %v2092 = vpack.c.bf16 %v2088, %v2088
        %v2093 = vpack.c.bf16 %v2089, %v2089
        %v2094 = vpack.c.bf16 %v2090, %v2090
        %v2095 = vld [vmem:[#allocation7] sm:$0xf]
        %v2096 = vld [vmem:[#allocation7 + $0x4] sm:$0xf]
        %v2097 = vld [vmem:[#allocation7 + $0x8] sm:$0xf]
        %v2098 = vld [vmem:[#allocation7 + $0xc] sm:$0xf]
        %v2099 = vld [vmem:[#allocation7 + $0x10] sm:$0xf]
        %v2100 = vld [vmem:[#allocation7 + $0x14] sm:$0xf]
        %v2101 = vld [vmem:[#allocation7 + $0x18] sm:$0xf]
        %v2102 = vld [vmem:[#allocation7 + $0x1c] sm:$0xf]
        %v2103 = vld [vmem:[#allocation7 + $0x20] sm:$0xf]
        %v2104 = vld [vmem:[#allocation7 + $0x24] sm:$0xf]
        %v2105 = vld [vmem:[#allocation7 + $0x28] sm:$0xf]
        %v2106 = vld [vmem:[#allocation7 + $0x2c] sm:$0xf]
        %v2107 = vld [vmem:[#allocation7 + $0x30] sm:$0xf]
        %v2108 = vld [vmem:[#allocation7 + $0x34] sm:$0xf]
        %v2109 = vld [vmem:[#allocation7 + $0x38] sm:$0xf]
        %v2110 = vld [vmem:[#allocation7 + $0x3c] sm:$0xf]
        %v2111 = vld [vmem:[#allocation7 + $0x40] sm:$0xf]
        %v2112 = vld [vmem:[#allocation7 + $0x44] sm:$0xf]
        %v2113 = vld [vmem:[#allocation7 + $0x48] sm:$0xf]
        %v2114 = vld [vmem:[#allocation7 + $0x4c] sm:$0xf]
        %v2115 = vld [vmem:[#allocation7 + $0x50] sm:$0xf]
        %v2116 = vld [vmem:[#allocation7 + $0x54] sm:$0xf]
        %v2117 = vld [vmem:[#allocation7 + $0x58] sm:$0xf]
        %v2118 = vld [vmem:[#allocation7 + $0x5c] sm:$0xf]
        %v2119 = vld [vmem:[#allocation7 + $0x60] sm:$0xf]
        %v2120 = vld [vmem:[#allocation7 + $0x64] sm:$0xf]
        %v2121 = vld [vmem:[#allocation7 + $0x68] sm:$0xf]
        %v2122 = vld [vmem:[#allocation7 + $0x6c] sm:$0xf]
        %v2123 = vld [vmem:[#allocation7 + $0x70] sm:$0xf]
        %v2124 = vld [vmem:[#allocation7 + $0x74] sm:$0xf]
        %v2125 = vld [vmem:[#allocation7 + $0x78] sm:$0xf]
        %v2126 = vld [vmem:[#allocation7 + $0x7c] sm:$0xf]
        %v2127 = vld [vmem:[#allocation7 + $0x80] sm:$0xf]
        %v2128 = vld [vmem:[#allocation7 + $0x84] sm:$0xf]
        %v2129 = vld [vmem:[#allocation7 + $0x88] sm:$0xf]
        %v2130 = vld [vmem:[#allocation7 + $0x8c] sm:$0xf]
        %v2131 = vld [vmem:[#allocation7 + $0x90] sm:$0xf]
        %v2132 = vld [vmem:[#allocation7 + $0x94] sm:$0xf]
        %v2133 = vld [vmem:[#allocation7 + $0x98] sm:$0xf]
        %v2134 = vld [vmem:[#allocation7 + $0x9c] sm:$0xf]
        %v2135 = vld [vmem:[#allocation7 + $0xa0] sm:$0xf]
        %v2136 = vld [vmem:[#allocation7 + $0xa4] sm:$0xf]
        %v2137 = vld [vmem:[#allocation7 + $0xa8] sm:$0xf]
        %v2138 = vld [vmem:[#allocation7 + $0xac] sm:$0xf]
        %v2139 = vld [vmem:[#allocation7 + $0xb0] sm:$0xf]
        %v2140 = vld [vmem:[#allocation7 + $0xb4] sm:$0xf]
        %v2141 = vld [vmem:[#allocation7 + $0xb8] sm:$0xf]
        %v2142 = vld [vmem:[#allocation7 + $0xbc] sm:$0xf]
        %v2143 = vld [vmem:[#allocation7 + $0xc0] sm:$0xf]
        %v2144 = vld [vmem:[#allocation7 + $0xc4] sm:$0xf]
        %v2145 = vld [vmem:[#allocation7 + $0xc8] sm:$0xf]
        %v2146 = vld [vmem:[#allocation7 + $0xcc] sm:$0xf]
        %v2147 = vld [vmem:[#allocation7 + $0xd0] sm:$0xf]
        %v2148 = vld [vmem:[#allocation7 + $0xd4] sm:$0xf]
        %v2149 = vld [vmem:[#allocation7 + $0xd8] sm:$0xf]
        %v2150 = vld [vmem:[#allocation7 + $0xdc] sm:$0xf]
        %v2151 = vld [vmem:[#allocation7 + $0xe0] sm:$0xf]
        %v2152 = vld [vmem:[#allocation7 + $0xe4] sm:$0xf]
        %v2153 = vld [vmem:[#allocation7 + $0xe8] sm:$0xf]
        %v2154 = vld [vmem:[#allocation7 + $0xec] sm:$0xf]
        %v2155 = vld [vmem:[#allocation7 + $0xf0] sm:$0xf]
        %v2156 = vld [vmem:[#allocation7 + $0xf4] sm:$0xf]
        %v2157 = vld [vmem:[#allocation7 + $0xf8] sm:$0xf]
        %v2158 = vld [vmem:[#allocation7 + $0xfc] sm:$0xf]
        %v2159 = vld [vmem:[%s6] sm:$0x1]
        %v2161 = vperm.slane %v2159, 0
        %v2227 = vunpack.c.l.b16 %v2095
        %v2228 = vunpack.c.l.b16 %v2096
        %v2229 = vunpack.c.l.b16 %v2097
        %v2230 = vunpack.c.l.b16 %v2098
        %v2231 = vunpack.c.l.b16 %v2099
        %v2232 = vunpack.c.l.b16 %v2100
        %v2233 = vunpack.c.l.b16 %v2101
        %v2234 = vunpack.c.l.b16 %v2102
        %v2235 = vunpack.c.l.b16 %v2103
        %v2236 = vunpack.c.l.b16 %v2104
        %v2237 = vunpack.c.l.b16 %v2105
        %v2238 = vunpack.c.l.b16 %v2106
        %v2239 = vunpack.c.l.b16 %v2107
        %v2240 = vunpack.c.l.b16 %v2108
        %v2241 = vunpack.c.l.b16 %v2109
        %v2242 = vunpack.c.l.b16 %v2110
        %v2243 = vunpack.c.l.b16 %v2111
        %v2244 = vunpack.c.l.b16 %v2112
        %v2245 = vunpack.c.l.b16 %v2113
        %v2246 = vunpack.c.l.b16 %v2114
        %v2247 = vunpack.c.l.b16 %v2115
        %v2248 = vunpack.c.l.b16 %v2116
        %v2249 = vunpack.c.l.b16 %v2117
        %v2250 = vunpack.c.l.b16 %v2118
        %v2251 = vunpack.c.l.b16 %v2119
        %v2252 = vunpack.c.l.b16 %v2120
        %v2253 = vunpack.c.l.b16 %v2121
        %v2254 = vunpack.c.l.b16 %v2122
        %v2255 = vunpack.c.l.b16 %v2123
        %v2256 = vunpack.c.l.b16 %v2124
        %v2257 = vunpack.c.l.b16 %v2125
        %v2258 = vunpack.c.l.b16 %v2126
        %v2259 = vunpack.c.l.b16 %v2127
        %v2260 = vunpack.c.l.b16 %v2128
        %v2261 = vunpack.c.l.b16 %v2129
        %v2262 = vunpack.c.l.b16 %v2130
        %v2263 = vunpack.c.l.b16 %v2131
        %v2264 = vunpack.c.l.b16 %v2132
        %v2265 = vunpack.c.l.b16 %v2133
        %v2266 = vunpack.c.l.b16 %v2134
        %v2267 = vunpack.c.l.b16 %v2135
        %v2268 = vunpack.c.l.b16 %v2136
        %v2269 = vunpack.c.l.b16 %v2137
        %v2270 = vunpack.c.l.b16 %v2138
        %v2271 = vunpack.c.l.b16 %v2139
        %v2272 = vunpack.c.l.b16 %v2140
        %v2273 = vunpack.c.l.b16 %v2141
        %v2274 = vunpack.c.l.b16 %v2142
        %v2275 = vunpack.c.l.b16 %v2143
        %v2276 = vunpack.c.l.b16 %v2144
        %v2277 = vunpack.c.l.b16 %v2145
        %v2278 = vunpack.c.l.b16 %v2146
        %v2279 = vunpack.c.l.b16 %v2147
        %v2280 = vunpack.c.l.b16 %v2148
        %v2281 = vunpack.c.l.b16 %v2149
        %v2282 = vunpack.c.l.b16 %v2150
        %v2283 = vunpack.c.l.b16 %v2151
        %v2284 = vunpack.c.l.b16 %v2152
        %v2285 = vunpack.c.l.b16 %v2153
        %v2286 = vunpack.c.l.b16 %v2154
        %v2287 = vunpack.c.l.b16 %v2155
        %v2288 = vunpack.c.l.b16 %v2156
        %v2289 = vunpack.c.l.b16 %v2157
        %v2290 = vunpack.c.l.b16 %v2158
        %v2291 = vpack.c.b16 %v2228, %v2227
        %v2292 = vpack.c.b16 %v2230, %v2229
        %v2293 = vpack.c.b16 %v2232, %v2231
        %v2294 = vpack.c.b16 %v2234, %v2233
        %v2295 = vpack.c.b16 %v2236, %v2235
        %v2296 = vpack.c.b16 %v2238, %v2237
        %v2297 = vpack.c.b16 %v2240, %v2239
        %v2298 = vpack.c.b16 %v2242, %v2241
        %v2299 = vpack.c.b16 %v2244, %v2243
        %v2300 = vpack.c.b16 %v2246, %v2245
        %v2301 = vpack.c.b16 %v2248, %v2247
        %v2302 = vpack.c.b16 %v2250, %v2249
        %v2303 = vpack.c.b16 %v2252, %v2251
        %v2304 = vpack.c.b16 %v2254, %v2253
        %v2305 = vpack.c.b16 %v2256, %v2255
        %v2306 = vpack.c.b16 %v2258, %v2257
        %v2307 = vpack.c.b16 %v2260, %v2259
        %v2308 = vpack.c.b16 %v2262, %v2261
        %v2309 = vpack.c.b16 %v2264, %v2263
        %v2310 = vpack.c.b16 %v2266, %v2265
        %v2311 = vpack.c.b16 %v2268, %v2267
        %v2312 = vpack.c.b16 %v2270, %v2269
        %v2313 = vpack.c.b16 %v2272, %v2271
        %v2314 = vpack.c.b16 %v2274, %v2273
        %v2315 = vpack.c.b16 %v2276, %v2275
        %v2316 = vpack.c.b16 %v2278, %v2277
        %v2317 = vpack.c.b16 %v2280, %v2279
        %v2318 = vpack.c.b16 %v2282, %v2281
        %v2319 = vpack.c.b16 %v2284, %v2283
        %v2320 = vpack.c.b16 %v2286, %v2285
        %v2321 = vpack.c.b16 %v2288, %v2287
        %v2322 = vpack.c.b16 %v2290, %v2289
        %2355 = vmatpush.bf16.msra.mxu0 %v2298
        %2356 = vmatpush.bf16.msra.mxu0 %v2297
        %2357 = vmatpush.bf16.msra.mxu0 %v2296
        %2358 = vmatpush.bf16.msra.mxu0 %v2295
        %2359 = vmatpush.bf16.msra.mxu0 %v2294
        %2360 = vmatpush.bf16.msra.mxu0 %v2293
        %2361 = vmatpush.bf16.msra.mxu0 %v2292
        %2362 = vmatpush.bf16.msra.mxu0 %v2291
        %2363 = vmatmul.bf16.gmra.mxu0 %v2091
        %v2364 = vpop.f32.mrf.mxu0
        %v2365 = vadd.f32 %v2161, %v2364
        %v2366 = vpop.f32.mrf.mxu0
        %2367 = vdwg.mxu0
        %2368 = vmatpush.bf16.msra.mxu0 %v2306
        %2369 = vmatpush.bf16.msra.mxu0 %v2305
        %2370 = vmatpush.bf16.msra.mxu0 %v2304
        %2371 = vmatpush.bf16.msra.mxu0 %v2303
        %2372 = vmatpush.bf16.msra.mxu0 %v2302
        %2373 = vmatpush.bf16.msra.mxu0 %v2301
        %2374 = vmatpush.bf16.msra.mxu0 %v2300
        %2375 = vmatpush.bf16.msra.mxu0 %v2299
        %2376 = vmatmul.bf16.gmra.mxu0 %v2092
        %v2377 = vpop.f32.mrf.mxu0
        %v2378 = vadd.f32 %v2365, %v2377
        %v2379 = vpop.f32.mrf.mxu0
        %2380 = vdwg.mxu0
        %2381 = vmatpush.bf16.msra.mxu0 %v2314
        %2382 = vmatpush.bf16.msra.mxu0 %v2313
        %2383 = vmatpush.bf16.msra.mxu0 %v2312
        %2384 = vmatpush.bf16.msra.mxu0 %v2311
        %2385 = vmatpush.bf16.msra.mxu0 %v2310
        %2386 = vmatpush.bf16.msra.mxu0 %v2309
        %2387 = vmatpush.bf16.msra.mxu0 %v2308
        %2388 = vmatpush.bf16.msra.mxu0 %v2307
        %2389 = vmatmul.bf16.gmra.mxu0 %v2093
        %v2390 = vpop.f32.mrf.mxu0
        %v2391 = vadd.f32 %v2378, %v2390
        %v2392 = vpop.f32.mrf.mxu0
        %2393 = vdwg.mxu0
        %2394 = vmatpush.bf16.msra.mxu0 %v2322
        %2395 = vmatpush.bf16.msra.mxu0 %v2321
        %2396 = vmatpush.bf16.msra.mxu0 %v2320
        %2397 = vmatpush.bf16.msra.mxu0 %v2319
        %2398 = vmatpush.bf16.msra.mxu0 %v2318
        %2399 = vmatpush.bf16.msra.mxu0 %v2317
        %2400 = vmatpush.bf16.msra.mxu0 %v2316
        %2401 = vmatpush.bf16.msra.mxu0 %v2315
        %2402 = vmatmul.bf16.gmra.mxu0 %v2094
        %v2403 = vpop.f32.mrf.mxu0
        %v2404 = vadd.f32 %v2391, %v2403
        %v2405 = vpop.f32.mrf.mxu0
        %2406 = vdwg.mxu0
        %v2407 = vtanh.pop %v2404
        %2408 = vst [vmem:[%s326] sm:$0xff] %v2407
        %p2409 = scmp.lt.s32.totalorder %s20, 1
        %s2410 = scalar_select %p2409, %s20, 1
        %s2411 = smul.addr %s2410, 8
        %s2412 = scalar_lea.vmem %s7, %s2411
        // Predicated region
        $region61: #{actor_forward.1} parent=47 // pred_check
          %p2413 = pneg %p190
        $region62: #{actor_forward.1} parent=47 // pred_check_branch
          %2415 = sbr.rel (%p2413) target = $region64
        $region63: #{actor_forward.1} parent=47 // pred_region
          _
        $region64: #{actor_forward.1} parent=47 // pred_fallthru
          _
      $region48: #{actor_forward.1} parent=5 // pred_fallthru
        _
      %p2416 = scmp.le.s32.totalorder 2, %s15
      // Predicated region
      $region65: #{actor_forward.1} parent=5 // pred_check
        %p2417 = pneg %p2416
      $region66: #{actor_forward.1} parent=5 // pred_check_branch
        %2419 = sbr.rel (%p2417) target = $region68
      $region67: #{actor_forward.1} parent=5 // pred_region
        %s2420 = ssub.s32 %s15, 2
        // Predicated region
        $region69: #{actor_forward.1} parent=67 // pred_check
          %p2421 = pneg %p196
        $region70: #{actor_forward.1} parent=67 // pred_check_branch
          %2423 = sbr.rel (%p2421) target = $region72
        $region71: #{actor_forward.1} parent=67 // pred_region
          %p2424 = scmp.lt.s32.totalorder %s21, 1
          %s2425 = scalar_select %p2424, %s21, 1
          %s2426 = smul.addr %s2425, 8
          %s2427 = scalar_lea.vmem %s7, %s2426
        $region72: #{actor_forward.1} parent=67 // pred_fallthru
          _
      $region68: #{actor_forward.1} parent=5 // pred_fallthru
        _
    $region6: #{actor_forward.1} parent=1 // loop_footer
      %s19 = sadd.s32 1, %s15
    $region7: #{actor_forward.1} parent=1 // loop_footer_branch
      %14 = sbr.rel target = $region3
    $region8: #{actor_forward.1} parent=1 // loop_exit
      _
    %2428 = vsyncpa [#allocation4], 1
    %s2429 = scalar_lea.sflag [#allocation4], 1
    %2430 = vsyncpa %s2429, 1
    %2431 = vsyncpa [#allocation6], 1

</llo_original>
